<compile_context>
chip_gen: v6e
topology: v6e:2x2x1
jax: 0.10.0
libtpu: 0.0.40
codegen_flags: <defaults>
</compile_context>

<pallas_src>
import numpy as np
import jax
import jax.numpy as jnp
from jax import lax
from jax.experimental import pallas as pl
from jax.experimental.pallas import tpu as pltpu

# Hyper-parameters from ParallelWHResNet.__init__
NB1, NA1 = 4, 4        # G1 = MimoLinearDynamicalOperator(1, 2, n_b=4, n_a=4, n_k=1)
NB2, NA2 = 4, 4        # G2 = MimoLinearDynamicalOperator(2, 1, n_b=4, n_a=4, n_k=1)
NB3, NA3 = 6, 6        # G3 = SisoLinearDynamicalOperator(n_b=6, n_a=6, n_k=1)
N_HIDDEN = 10          # F_nl = MimoChannelWiseNonLinearity(2, n_hidden=10) (tanh)
N_K = 1                # input delay of all dynamical operators

LANES = 128            # lane width of the packed working slab
UNROLL = 8             # time steps per recursion block (one (8, LANES) tile load/store)


def _parwh_kernel(u_ref,                          # (TP, L) lane-packed input (u in blocks 0..2)
                  b1_ref, a1_ref,                 # (6, L)  phase-1 FIR/IIR per-lane coeffs
                  w1_ref, bh_ref, w2_ref, bo_ref, # (10,L)x3, (1,L) per-lane MLP coeffs
                  b2_ref, a2_ref,                 # (4, L)  phase-2 FIR/IIR per-lane coeffs
                  y1_ref, y2_ref,                 # (TP, L) lane-dense outputs
                  w_scr):                         # (TP, L) FIR slab scratch
    TP, L = w_scr.shape
    nblk = TP // UNROLL

    def fir_to_scratch(x, b_ref):
        # w[t, l] = sum_k b[k, l] * x[t - N_K - k, l]  (zero initial conditions).
        # One shifted copy of the lane-packed slab per tap, shared by every channel.
        n_tap = b_ref.shape[0]
        acc = jnp.zeros((TP, L), jnp.float32)
        for k in range(n_tap):
            s = N_K + k
            shifted = jnp.concatenate(
                [jnp.zeros((s, L), jnp.float32), x[: TP - s, :]], axis=0)
            acc = acc + b_ref[k:k + 1, :] * shifted
        w_scr[...] = acc

    def iir_to(y_out_ref, a_ref):
        # y[t, l] = w[t, l] - sum_j a[j, l] * y[t-1-j, l]; sequential over time,
        # vectorized over all lanes (channels x batch).  Blocked by UNROLL: one aligned
        # (UNROLL, L) load of w and one unmasked (UNROLL, L) store of y per block.
        # TODO(synk): for very long sequences, block this recursion via its
        # companion/state-space form onto the MXU and split the two phases across
        # v7x's two TensorCores.
        n_a = a_ref.shape[0]
        a_rows = [a_ref[j:j + 1, :] for j in range(n_a)]   # hoisted (1, L) vregs

        def blk(bi, state):
            base = pl.multiple_of(bi * UNROLL, UNROLL)
            w_tile = w_scr[pl.ds(base, UNROLL), :]
            rows = []
            for r in range(UNROLL):                        # static unroll
                prods = [a_rows[j] * state[j] for j in range(n_a)]
                while len(prods) > 1:                      # tree-sum: shorter dep chain
                    nxt = [prods[i] + prods[i + 1]
                           for i in range(0, len(prods) - 1, 2)]
                    if len(prods) % 2:
                        nxt.append(prods[-1])
                    prods = nxt
                y_t = w_tile[r:r + 1, :] - prods[0]
                rows.append(y_t)
                state = (y_t,) + state[:-1]
            y_out_ref[pl.ds(base, UNROLL), :] = jnp.concatenate(rows, axis=0)
            return state

        init = tuple(jnp.zeros((1, L), jnp.float32) for _ in range(n_a))
        lax.fori_loop(0, nblk, blk, init)

    # Phase 1: {G1 ch0, G1 ch1, G3} lane-packed -> one FIR slab + one recursion.
    fir_to_scratch(u_ref[...], b1_ref)
    iir_to(y1_ref, a1_ref)

    # F_nl: channel-wise 1 -> 10 -> 1 tanh MLP, lane-dense, two partial accumulators.
    y1 = y1_ref[...]
    acc0 = jnp.zeros((TP, L), jnp.float32)
    acc1 = jnp.zeros((TP, L), jnp.float32)
    for h in range(N_HIDDEN):
        th = jnp.tanh(w1_ref[h:h + 1, :] * y1 + bh_ref[h:h + 1, :])
        contrib = w2_ref[h:h + 1, :] * th
        if h % 2 == 0:
            acc0 = acc0 + contrib
        else:
            acc1 = acc1 + contrib
    z = acc0 + acc1 + bo_ref[0:1, :]

    # Phase 2: {G2 from z0, G2 from z1} lane-packed -> one FIR slab + one recursion.
    fir_to_scratch(z, b2_ref)
    iir_to(y2_ref, a2_ref)


def _round_up(x, m):
    return ((x + m - 1) // m) * m


def _pack_rows(rows, n_tap, batch, lanes):
    """Per-lane coefficient rows: channel c occupies lanes [c*batch, (c+1)*batch)."""
    out = jnp.zeros((n_tap, lanes), jnp.float32)
    for c, r in enumerate(rows):
        col = jnp.zeros((n_tap,), jnp.float32).at[: r.shape[0]].set(r)
        out = out.at[:, c * batch:(c + 1) * batch].set(
            jnp.broadcast_to(col[:, None], (n_tap, batch)))
    return out


@jax.jit
def parallel_wh_resnet(u, params):
    """u: (batch, seq_len, 1) float32 -> (batch, seq_len, 1) float32."""
    B, T, C = u.shape
    assert C == 1
    L = max(LANES, _round_up(3 * B, LANES))     # 3 phase-1 channel blocks on the lanes
    TP = _round_up(T, UNROLL)                   # pad time to a multiple of the unroll

    u_tb = jnp.transpose(u[..., 0], (1, 0)).astype(jnp.float32)          # (T, B)
    u_tb = jnp.pad(u_tb, ((0, TP - T), (0, 0)))                          # (TP, B)
    u_rep = jnp.pad(jnp.tile(u_tb, (1, 3)), ((0, 0), (0, L - 3 * B)))    # (TP, L)

    # Per-lane coefficients (phase-1 channel blocks: G1 ch0 | G1 ch1 | G3, 6 taps).
    p = params
    b1 = _pack_rows([p["g1_b"][0], p["g1_b"][1], p["g3_b"]], max(NB1, NB3), B, L)
    a1 = _pack_rows([p["g1_a"][0], p["g1_a"][1], p["g3_a"]], max(NA1, NA3), B, L)
    w1 = _pack_rows([p["fnl_w1"][0], p["fnl_w1"][1]], N_HIDDEN, B, L)
    bh = _pack_rows([p["fnl_b1"][0], p["fnl_b1"][1]], N_HIDDEN, B, L)
    w2 = _pack_rows([p["fnl_w2"][0], p["fnl_w2"][1]], N_HIDDEN, B, L)
    bo = _pack_rows([p["fnl_b2"][0:1], p["fnl_b2"][1:2]], 1, B, L)
    b2 = _pack_rows([p["g2_b"][0], p["g2_b"][1]], NB2, B, L)
    a2 = _pack_rows([p["g2_a"][0], p["g2_a"][1]], NA2, B, L)

    vmem = pl.BlockSpec(memory_space=pltpu.MemorySpace.VMEM)
    y1_slab, y2_slab = pl.pallas_call(
        _parwh_kernel,
        out_shape=(jax.ShapeDtypeStruct((TP, L), jnp.float32),
                   jax.ShapeDtypeStruct((TP, L), jnp.float32)),
        in_specs=[vmem] * 9,
        out_specs=(vmem, vmem),
        scratch_shapes=[pltpu.VMEM((TP, L), jnp.float32)],
    )(u_rep, b1, a1, w1, bh, w2, bo, b2, a2)

    # y = G2(z0) + G2(z1) + G3(u): channel blocks 0/1 of y2 and block 2 of y1.
    y_tb = y2_slab[:T, 0:B] + y2_slab[:T, B:2 * B] + y1_slab[:T, 2 * B:3 * B]
    return jnp.transpose(y_tb, (1, 0))[..., None]               # (batch, seq_len, 1)


def init_params(key):
    """Deterministic synthetic parameters (shapes from the module's __init__)."""
    ks = jax.random.split(key, 10)
    f32 = jnp.float32
    return {
        # G1: b/a coeffs of shape (out=2, in=1, 4) -> flattened to (2, 4)
        "g1_b": 0.01 * jax.random.normal(ks[0], (2, NB1), f32),
        "g1_a": 0.01 * jax.random.normal(ks[1], (2, NA1), f32),
        # F_nl: per-channel Linear(1,10) weight/bias and Linear(10,1) weight/bias
        "fnl_w1": jax.random.normal(ks[2], (2, N_HIDDEN), f32),
        "fnl_b1": 0.5 * jax.random.normal(ks[3], (2, N_HIDDEN), f32),
        "fnl_w2": jax.random.normal(ks[4], (2, N_HIDDEN), f32) / np.sqrt(N_HIDDEN),
        "fnl_b2": 0.1 * jax.random.normal(ks[5], (2,), f32),
        # G2: b/a coeffs of shape (out=1, in=2, 4) -> flattened to (2, 4)
        "g2_b": 0.01 * jax.random.normal(ks[6], (2, NB2), f32),
        "g2_a": 0.01 * jax.random.normal(ks[7], (2, NA2), f32),
        # G3: SISO, (6,)
        "g3_b": 0.01 * jax.random.normal(ks[8], (NB3,), f32),
        "g3_a": 0.01 * jax.random.normal(ks[9], (NA3,), f32),
    }


# ---------------- pure-JAX reference (same semantics, different code path) -----------
def _fir_ref(x, b, n_k=N_K):
    T, B = x.shape
    acc = jnp.zeros_like(x)
    for k in range(b.shape[0]):
        s = n_k + k
        acc = acc + b[k] * jnp.concatenate(
            [jnp.zeros((s, B), x.dtype), x[: T - s]], axis=0)
    return acc


def _iir_ref(w, a):
    n_a = a.shape[0]
    _, B = w.shape

    def step(y_hist, w_t):
        y_t = w_t - jnp.sum(a[:, None] * y_hist, axis=0)
        return jnp.concatenate([y_t[None], y_hist[:-1]], axis=0), y_t

    _, y = lax.scan(step, jnp.zeros((n_a, B), w.dtype), w)
    return y


def _lfilter_ref(x, b, a):
    return _iir_ref(_fir_ref(x, b), a)


def reference(u, p):
    u_tb = jnp.transpose(u[..., 0], (1, 0))
    y1_0 = _lfilter_ref(u_tb, p["g1_b"][0], p["g1_a"][0])
    y1_1 = _lfilter_ref(u_tb, p["g1_b"][1], p["g1_a"][1])

    def mlp(x, c):
        h = jnp.tanh(x[..., None] * p["fnl_w1"][c] + p["fnl_b1"][c])
        return jnp.sum(h * p["fnl_w2"][c], axis=-1) + p["fnl_b2"][c]

    z0, z1 = mlp(y1_0, 0), mlp(y1_1, 1)
    y2 = (_lfilter_ref(z0, p["g2_b"][0], p["g2_a"][0])
          + _lfilter_ref(z1, p["g2_b"][1], p["g2_a"][1]))
    y3 = _lfilter_ref(u_tb, p["g3_b"], p["g3_a"])
    return jnp.transpose(y2 + y3, (1, 0))[..., None]


if __name__ == "__main__":
    key = jax.random.PRNGKey(0)
    k_u, k_p = jax.random.split(key)
    batch, seq_len = 4, 64
    u = jax.random.normal(k_u, (batch, seq_len, 1), jnp.float32)
    params = init_params(k_p)

    y = jax.block_until_ready(parallel_wh_resnet(u, params))
    assert y.shape == (batch, seq_len, 1) and y.dtype == jnp.float32

    y_ref = reference(u, params)
    np.testing.assert_allclose(np.asarray(y), np.asarray(y_ref), rtol=1e-4, atol=1e-5)
    print("KERNEL_OK")
</pallas_src>

<mosaic_0001>
module attributes {stable_mosaic.version = 11 : i64} {
  func.func @_parwh_kernel(%arg0: memref<64x128xf32, #tpu.memory_space<vmem>>, %arg1: memref<6x128xf32, #tpu.memory_space<vmem>>, %arg2: memref<6x128xf32, #tpu.memory_space<vmem>>, %arg3: memref<10x128xf32, #tpu.memory_space<vmem>>, %arg4: memref<10x128xf32, #tpu.memory_space<vmem>>, %arg5: memref<10x128xf32, #tpu.memory_space<vmem>>, %arg6: memref<1x128xf32, #tpu.memory_space<vmem>>, %arg7: memref<4x128xf32, #tpu.memory_space<vmem>>, %arg8: memref<4x128xf32, #tpu.memory_space<vmem>>, %arg9: memref<64x128xf32, #tpu.memory_space<vmem>>, %arg10: memref<64x128xf32, #tpu.memory_space<vmem>>, %arg11: memref<64x128xf32, #tpu.memory_space<vmem>>) attributes {dimension_semantics = [], scalar_prefetch = 0 : i64, scratch_operands = 1 : i64, tpu.core_type = #tpu.core_type<tc>} {
    %c0 = arith.constant 0 : index
    %c0_0 = arith.constant 0 : index
    %0 = vector.load %arg0[%c0, %c0_0] : memref<64x128xf32, #tpu.memory_space<vmem>>, vector<64x128xf32>
    %cst = arith.constant 0.000000e+00 : f32
    %1 = vector.broadcast %cst : f32 to vector<64x128xf32>
    %cst_1 = arith.constant 0.000000e+00 : f32
    %2 = vector.broadcast %cst_1 : f32 to vector<1x128xf32>
    %3 = vector.extract_strided_slice %0 {offsets = [0, 0], sizes = [63, 128], strides = [1, 1]} : vector<64x128xf32> to vector<63x128xf32>
    %4 = tpu.concatenate %2, %3 in 0 : vector<1x128xf32>, vector<63x128xf32> -> vector<64x128xf32>
    %c0_2 = arith.constant 0 : index
    %c0_3 = arith.constant 0 : index
    %5 = vector.load %arg1[%c0_2, %c0_3] : memref<6x128xf32, #tpu.memory_space<vmem>>, vector<1x128xf32>
    %6 = vector.broadcast %5 : vector<1x128xf32> to vector<64x128xf32>
    %7 = arith.mulf %6, %4 : vector<64x128xf32>
    %8 = arith.addf %1, %7 : vector<64x128xf32>
    %cst_4 = arith.constant 0.000000e+00 : f32
    %9 = vector.broadcast %cst_4 : f32 to vector<2x128xf32>
    %10 = vector.extract_strided_slice %0 {offsets = [0, 0], sizes = [62, 128], strides = [1, 1]} : vector<64x128xf32> to vector<62x128xf32>
    %11 = tpu.concatenate %9, %10 in 0 : vector<2x128xf32>, vector<62x128xf32> -> vector<64x128xf32>
    %c1 = arith.constant 1 : index
    %c0_5 = arith.constant 0 : index
    %12 = vector.load %arg1[%c1, %c0_5] : memref<6x128xf32, #tpu.memory_space<vmem>>, vector<1x128xf32>
    %13 = vector.broadcast %12 : vector<1x128xf32> to vector<64x128xf32>
    %14 = arith.mulf %13, %11 : vector<64x128xf32>
    %15 = arith.addf %8, %14 : vector<64x128xf32>
    %cst_6 = arith.constant 0.000000e+00 : f32
    %16 = vector.broadcast %cst_6 : f32 to vector<3x128xf32>
    %17 = vector.extract_strided_slice %0 {offsets = [0, 0], sizes = [61, 128], strides = [1, 1]} : vector<64x128xf32> to vector<61x128xf32>
    %18 = tpu.concatenate %16, %17 in 0 : vector<3x128xf32>, vector<61x128xf32> -> vector<64x128xf32>
    %c2 = arith.constant 2 : index
    %c0_7 = arith.constant 0 : index
    %19 = vector.load %arg1[%c2, %c0_7] : memref<6x128xf32, #tpu.memory_space<vmem>>, vector<1x128xf32>
    %20 = vector.broadcast %19 : vector<1x128xf32> to vector<64x128xf32>
    %21 = arith.mulf %20, %18 : vector<64x128xf32>
    %22 = arith.addf %15, %21 : vector<64x128xf32>
    %cst_8 = arith.constant 0.000000e+00 : f32
    %23 = vector.broadcast %cst_8 : f32 to vector<4x128xf32>
    %24 = vector.extract_strided_slice %0 {offsets = [0, 0], sizes = [60, 128], strides = [1, 1]} : vector<64x128xf32> to vector<60x128xf32>
    %25 = tpu.concatenate %23, %24 in 0 : vector<4x128xf32>, vector<60x128xf32> -> vector<64x128xf32>
    %c3 = arith.constant 3 : index
    %c0_9 = arith.constant 0 : index
    %26 = vector.load %arg1[%c3, %c0_9] : memref<6x128xf32, #tpu.memory_space<vmem>>, vector<1x128xf32>
    %27 = vector.broadcast %26 : vector<1x128xf32> to vector<64x128xf32>
    %28 = arith.mulf %27, %25 : vector<64x128xf32>
    %29 = arith.addf %22, %28 : vector<64x128xf32>
    %cst_10 = arith.constant 0.000000e+00 : f32
    %30 = vector.broadcast %cst_10 : f32 to vector<5x128xf32>
    %31 = vector.extract_strided_slice %0 {offsets = [0, 0], sizes = [59, 128], strides = [1, 1]} : vector<64x128xf32> to vector<59x128xf32>
    %32 = tpu.concatenate %30, %31 in 0 : vector<5x128xf32>, vector<59x128xf32> -> vector<64x128xf32>
    %c4 = arith.constant 4 : index
    %c0_11 = arith.constant 0 : index
    %33 = vector.load %arg1[%c4, %c0_11] : memref<6x128xf32, #tpu.memory_space<vmem>>, vector<1x128xf32>
    %34 = vector.broadcast %33 : vector<1x128xf32> to vector<64x128xf32>
    %35 = arith.mulf %34, %32 : vector<64x128xf32>
    %36 = arith.addf %29, %35 : vector<64x128xf32>
    %cst_12 = arith.constant 0.000000e+00 : f32
    %37 = vector.broadcast %cst_12 : f32 to vector<6x128xf32>
    %38 = vector.extract_strided_slice %0 {offsets = [0, 0], sizes = [58, 128], strides = [1, 1]} : vector<64x128xf32> to vector<58x128xf32>
    %39 = tpu.concatenate %37, %38 in 0 : vector<6x128xf32>, vector<58x128xf32> -> vector<64x128xf32>
    %c5 = arith.constant 5 : index
    %c0_13 = arith.constant 0 : index
    %40 = vector.load %arg1[%c5, %c0_13] : memref<6x128xf32, #tpu.memory_space<vmem>>, vector<1x128xf32>
    %41 = vector.broadcast %40 : vector<1x128xf32> to vector<64x128xf32>
    %42 = arith.mulf %41, %39 : vector<64x128xf32>
    %43 = arith.addf %36, %42 : vector<64x128xf32>
    %c0_14 = arith.constant 0 : index
    %c0_15 = arith.constant 0 : index
    %44 = vector.load %arg11[%c0_14, %c0_15] : memref<64x128xf32, #tpu.memory_space<vmem>>, vector<64x128xf32>
    tpu.vector_store %arg11[%c0_14, %c0_15], %43 {strides = array<i32>} : memref<64x128xf32, #tpu.memory_space<vmem>>, vector<64x128xf32>,
    %c0_16 = arith.constant 0 : index
    %c0_17 = arith.constant 0 : index
    %45 = vector.load %arg2[%c0_16, %c0_17] : memref<6x128xf32, #tpu.memory_space<vmem>>, vector<1x128xf32>
    %c1_18 = arith.constant 1 : index
    %c0_19 = arith.constant 0 : index
    %46 = vector.load %arg2[%c1_18, %c0_19] : memref<6x128xf32, #tpu.memory_space<vmem>>, vector<1x128xf32>
    %c2_20 = arith.constant 2 : index
    %c0_21 = arith.constant 0 : index
    %47 = vector.load %arg2[%c2_20, %c0_21] : memref<6x128xf32, #tpu.memory_space<vmem>>, vector<1x128xf32>
    %c3_22 = arith.constant 3 : index
    %c0_23 = arith.constant 0 : index
    %48 = vector.load %arg2[%c3_22, %c0_23] : memref<6x128xf32, #tpu.memory_space<vmem>>, vector<1x128xf32>
    %c4_24 = arith.constant 4 : index
    %c0_25 = arith.constant 0 : index
    %49 = vector.load %arg2[%c4_24, %c0_25] : memref<6x128xf32, #tpu.memory_space<vmem>>, vector<1x128xf32>
    %c5_26 = arith.constant 5 : index
    %c0_27 = arith.constant 0 : index
    %50 = vector.load %arg2[%c5_26, %c0_27] : memref<6x128xf32, #tpu.memory_space<vmem>>, vector<1x128xf32>
    %cst_28 = arith.constant 0.000000e+00 : f32
    %51 = vector.broadcast %cst_28 : f32 to vector<1x128xf32>
    %cst_29 = arith.constant 0.000000e+00 : f32
    %52 = vector.broadcast %cst_29 : f32 to vector<1x128xf32>
    %cst_30 = arith.constant 0.000000e+00 : f32
    %53 = vector.broadcast %cst_30 : f32 to vector<1x128xf32>
    %cst_31 = arith.constant 0.000000e+00 : f32
    %54 = vector.broadcast %cst_31 : f32 to vector<1x128xf32>
    %cst_32 = arith.constant 0.000000e+00 : f32
    %55 = vector.broadcast %cst_32 : f32 to vector<1x128xf32>
    %cst_33 = arith.constant 0.000000e+00 : f32
    %56 = vector.broadcast %cst_33 : f32 to vector<1x128xf32>
    %c0_i32 = arith.constant 0 : i32
    %c8_i32 = arith.constant 8 : i32
    %57 = arith.addi %c0_i32, %c8_i32 : i32
    %c1_i32 = arith.constant 1 : i32
    %58:6 = scf.for %arg12 = %c0_i32 to %57 step %c1_i32 iter_args(%arg13 = %51, %arg14 = %52, %arg15 = %53, %arg16 = %54, %arg17 = %55, %arg18 = %56) -> (vector<1x128xf32>, vector<1x128xf32>, vector<1x128xf32>, vector<1x128xf32>, vector<1x128xf32>, vector<1x128xf32>)  : i32 {
      %c8_i32_128 = arith.constant 8 : i32
      %216 = arith.muli %arg12, %c8_i32_128 : i32
      %217 = tpu.assume_multiple %216, 8 : i32
      %218 = arith.index_cast %217 : i32 to index
      %c0_129 = arith.constant 0 : index
      %219 = vector.load %arg11[%218, %c0_129] : memref<64x128xf32, #tpu.memory_space<vmem>>, vector<8x128xf32>
      %220 = arith.mulf %45, %arg13 : vector<1x128xf32>
      %221 = arith.mulf %46, %arg14 : vector<1x128xf32>
      %222 = arith.mulf %47, %arg15 : vector<1x128xf32>
      %223 = arith.mulf %48, %arg16 : vector<1x128xf32>
      %224 = arith.mulf %49, %arg17 : vector<1x128xf32>
      %225 = arith.mulf %50, %arg18 : vector<1x128xf32>
      %226 = arith.addf %220, %221 : vector<1x128xf32>
      %227 = arith.addf %222, %223 : vector<1x128xf32>
      %228 = arith.addf %224, %225 : vector<1x128xf32>
      %229 = arith.addf %226, %227 : vector<1x128xf32>
      %230 = arith.addf %229, %228 : vector<1x128xf32>
      %231 = vector.extract_strided_slice %219 {offsets = [0, 0], sizes = [1, 128], strides = [1, 1]} : vector<8x128xf32> to vector<1x128xf32>
      %232 = arith.subf %231, %230 : vector<1x128xf32>
      %233 = arith.mulf %45, %232 : vector<1x128xf32>
      %234 = arith.mulf %46, %arg13 : vector<1x128xf32>
      %235 = arith.mulf %47, %arg14 : vector<1x128xf32>
      %236 = arith.mulf %48, %arg15 : vector<1x128xf32>
      %237 = arith.mulf %49, %arg16 : vector<1x128xf32>
      %238 = arith.mulf %50, %arg17 : vector<1x128xf32>
      %239 = arith.addf %233, %234 : vector<1x128xf32>
      %240 = arith.addf %235, %236 : vector<1x128xf32>
      %241 = arith.addf %237, %238 : vector<1x128xf32>
      %242 = arith.addf %239, %240 : vector<1x128xf32>
      %243 = arith.addf %242, %241 : vector<1x128xf32>
      %244 = vector.extract_strided_slice %219 {offsets = [1, 0], sizes = [1, 128], strides = [1, 1]} : vector<8x128xf32> to vector<1x128xf32>
      %245 = arith.subf %244, %243 : vector<1x128xf32>
      %246 = arith.mulf %45, %245 : vector<1x128xf32>
      %247 = arith.mulf %46, %232 : vector<1x128xf32>
      %248 = arith.mulf %47, %arg13 : vector<1x128xf32>
      %249 = arith.mulf %48, %arg14 : vector<1x128xf32>
      %250 = arith.mulf %49, %arg15 : vector<1x128xf32>
      %251 = arith.mulf %50, %arg16 : vector<1x128xf32>
      %252 = arith.addf %246, %247 : vector<1x128xf32>
      %253 = arith.addf %248, %249 : vector<1x128xf32>
      %254 = arith.addf %250, %251 : vector<1x128xf32>
      %255 = arith.addf %252, %253 : vector<1x128xf32>
      %256 = arith.addf %255, %254 : vector<1x128xf32>
      %257 = vector.extract_strided_slice %219 {offsets = [2, 0], sizes = [1, 128], strides = [1, 1]} : vector<8x128xf32> to vector<1x128xf32>
      %258 = arith.subf %257, %256 : vector<1x128xf32>
      %259 = arith.mulf %45, %258 : vector<1x128xf32>
      %260 = arith.mulf %46, %245 : vector<1x128xf32>
      %261 = arith.mulf %47, %232 : vector<1x128xf32>
      %262 = arith.mulf %48, %arg13 : vector<1x128xf32>
      %263 = arith.mulf %49, %arg14 : vector<1x128xf32>
      %264 = arith.mulf %50, %arg15 : vector<1x128xf32>
      %265 = arith.addf %259, %260 : vector<1x128xf32>
      %266 = arith.addf %261, %262 : vector<1x128xf32>
      %267 = arith.addf %263, %264 : vector<1x128xf32>
      %268 = arith.addf %265, %266 : vector<1x128xf32>
      %269 = arith.addf %268, %267 : vector<1x128xf32>
      %270 = vector.extract_strided_slice %219 {offsets = [3, 0], sizes = [1, 128], strides = [1, 1]} : vector<8x128xf32> to vector<1x128xf32>
      %271 = arith.subf %270, %269 : vector<1x128xf32>
      %272 = arith.mulf %45, %271 : vector<1x128xf32>
      %273 = arith.mulf %46, %258 : vector<1x128xf32>
      %274 = arith.mulf %47, %245 : vector<1x128xf32>
      %275 = arith.mulf %48, %232 : vector<1x128xf32>
      %276 = arith.mulf %49, %arg13 : vector<1x128xf32>
      %277 = arith.mulf %50, %arg14 : vector<1x128xf32>
      %278 = arith.addf %272, %273 : vector<1x128xf32>
      %279 = arith.addf %274, %275 : vector<1x128xf32>
      %280 = arith.addf %276, %277 : vector<1x128xf32>
      %281 = arith.addf %278, %279 : vector<1x128xf32>
      %282 = arith.addf %281, %280 : vector<1x128xf32>
      %283 = vector.extract_strided_slice %219 {offsets = [4, 0], sizes = [1, 128], strides = [1, 1]} : vector<8x128xf32> to vector<1x128xf32>
      %284 = arith.subf %283, %282 : vector<1x128xf32>
      %285 = arith.mulf %45, %284 : vector<1x128xf32>
      %286 = arith.mulf %46, %271 : vector<1x128xf32>
      %287 = arith.mulf %47, %258 : vector<1x128xf32>
      %288 = arith.mulf %48, %245 : vector<1x128xf32>
      %289 = arith.mulf %49, %232 : vector<1x128xf32>
      %290 = arith.mulf %50, %arg13 : vector<1x128xf32>
      %291 = arith.addf %285, %286 : vector<1x128xf32>
      %292 = arith.addf %287, %288 : vector<1x128xf32>
      %293 = arith.addf %289, %290 : vector<1x128xf32>
      %294 = arith.addf %291, %292 : vector<1x128xf32>
      %295 = arith.addf %294, %293 : vector<1x128xf32>
      %296 = vector.extract_strided_slice %219 {offsets = [5, 0], sizes = [1, 128], strides = [1, 1]} : vector<8x128xf32> to vector<1x128xf32>
      %297 = arith.subf %296, %295 : vector<1x128xf32>
      %298 = arith.mulf %45, %297 : vector<1x128xf32>
      %299 = arith.mulf %46, %284 : vector<1x128xf32>
      %300 = arith.mulf %47, %271 : vector<1x128xf32>
      %301 = arith.mulf %48, %258 : vector<1x128xf32>
      %302 = arith.mulf %49, %245 : vector<1x128xf32>
      %303 = arith.mulf %50, %232 : vector<1x128xf32>
      %304 = arith.addf %298, %299 : vector<1x128xf32>
      %305 = arith.addf %300, %301 : vector<1x128xf32>
      %306 = arith.addf %302, %303 : vector<1x128xf32>
      %307 = arith.addf %304, %305 : vector<1x128xf32>
      %308 = arith.addf %307, %306 : vector<1x128xf32>
      %309 = vector.extract_strided_slice %219 {offsets = [6, 0], sizes = [1, 128], strides = [1, 1]} : vector<8x128xf32> to vector<1x128xf32>
      %310 = arith.subf %309, %308 : vector<1x128xf32>
      %311 = arith.mulf %45, %310 : vector<1x128xf32>
      %312 = arith.mulf %46, %297 : vector<1x128xf32>
      %313 = arith.mulf %47, %284 : vector<1x128xf32>
      %314 = arith.mulf %48, %271 : vector<1x128xf32>
      %315 = arith.mulf %49, %258 : vector<1x128xf32>
      %316 = arith.mulf %50, %245 : vector<1x128xf32>
      %317 = arith.addf %311, %312 : vector<1x128xf32>
      %318 = arith.addf %313, %314 : vector<1x128xf32>
      %319 = arith.addf %315, %316 : vector<1x128xf32>
      %320 = arith.addf %317, %318 : vector<1x128xf32>
      %321 = arith.addf %320, %319 : vector<1x128xf32>
      %322 = vector.extract_strided_slice %219 {offsets = [7, 0], sizes = [1, 128], strides = [1, 1]} : vector<8x128xf32> to vector<1x128xf32>
      %323 = arith.subf %322, %321 : vector<1x128xf32>
      %324 = tpu.concatenate %232, %245, %258, %271, %284, %297, %310, %323 in 0 : vector<1x128xf32>, vector<1x128xf32>, vector<1x128xf32>, vector<1x128xf32>, vector<1x128xf32>, vector<1x128xf32>, vector<1x128xf32>, vector<1x128xf32> -> vector<8x128xf32>
      %325 = arith.index_cast %217 : i32 to index
      %c0_130 = arith.constant 0 : index
      %326 = vector.load %arg9[%325, %c0_130] : memref<64x128xf32, #tpu.memory_space<vmem>>, vector<8x128xf32>
      tpu.vector_store %arg9[%325, %c0_130], %324 {strides = array<i32>} : memref<64x128xf32, #tpu.memory_space<vmem>>, vector<8x128xf32>,
      scf.yield %323, %310, %297, %284, %271, %258 : vector<1x128xf32>, vector<1x128xf32>, vector<1x128xf32>, vector<1x128xf32>, vector<1x128xf32>, vector<1x128xf32>
    }
    %c8_i32_34 = arith.constant 8 : i32
    %c0_35 = arith.constant 0 : index
    %c0_36 = arith.constant 0 : index
    %59 = vector.load %arg9[%c0_35, %c0_36] : memref<64x128xf32, #tpu.memory_space<vmem>>, vector<64x128xf32>
    %cst_37 = arith.constant 0.000000e+00 : f32
    %60 = vector.broadcast %cst_37 : f32 to vector<64x128xf32>
    %cst_38 = arith.constant 0.000000e+00 : f32
    %61 = vector.broadcast %cst_38 : f32 to vector<64x128xf32>
    %c0_39 = arith.constant 0 : index
    %c0_40 = arith.constant 0 : index
    %62 = vector.load %arg3[%c0_39, %c0_40] : memref<10x128xf32, #tpu.memory_space<vmem>>, vector<1x128xf32>
    %63 = vector.broadcast %62 : vector<1x128xf32> to vector<64x128xf32>
    %64 = arith.mulf %63, %59 : vector<64x128xf32>
    %c0_41 = arith.constant 0 : index
    %c0_42 = arith.constant 0 : index
    %65 = vector.load %arg4[%c0_41, %c0_42] : memref<10x128xf32, #tpu.memory_space<vmem>>, vector<1x128xf32>
    %66 = vector.broadcast %65 : vector<1x128xf32> to vector<64x128xf32>
    %67 = arith.addf %64, %66 : vector<64x128xf32>
    %68 = math.tanh %67 : vector<64x128xf32>
    %c0_43 = arith.constant 0 : index
    %c0_44 = arith.constant 0 : index
    %69 = vector.load %arg5[%c0_43, %c0_44] : memref<10x128xf32, #tpu.memory_space<vmem>>, vector<1x128xf32>
    %70 = vector.broadcast %69 : vector<1x128xf32> to vector<64x128xf32>
    %71 = arith.mulf %70, %68 : vector<64x128xf32>
    %72 = arith.addf %60, %71 : vector<64x128xf32>
    %c1_45 = arith.constant 1 : index
    %c0_46 = arith.constant 0 : index
    %73 = vector.load %arg3[%c1_45, %c0_46] : memref<10x128xf32, #tpu.memory_space<vmem>>, vector<1x128xf32>
    %74 = vector.broadcast %73 : vector<1x128xf32> to vector<64x128xf32>
    %75 = arith.mulf %74, %59 : vector<64x128xf32>
    %c1_47 = arith.constant 1 : index
    %c0_48 = arith.constant 0 : index
    %76 = vector.load %arg4[%c1_47, %c0_48] : memref<10x128xf32, #tpu.memory_space<vmem>>, vector<1x128xf32>
    %77 = vector.broadcast %76 : vector<1x128xf32> to vector<64x128xf32>
    %78 = arith.addf %75, %77 : vector<64x128xf32>
    %79 = math.tanh %78 : vector<64x128xf32>
    %c1_49 = arith.constant 1 : index
    %c0_50 = arith.constant 0 : index
    %80 = vector.load %arg5[%c1_49, %c0_50] : memref<10x128xf32, #tpu.memory_space<vmem>>, vector<1x128xf32>
    %81 = vector.broadcast %80 : vector<1x128xf32> to vector<64x128xf32>
    %82 = arith.mulf %81, %79 : vector<64x128xf32>
    %83 = arith.addf %61, %82 : vector<64x128xf32>
    %c2_51 = arith.constant 2 : index
    %c0_52 = arith.constant 0 : index
    %84 = vector.load %arg3[%c2_51, %c0_52] : memref<10x128xf32, #tpu.memory_space<vmem>>, vector<1x128xf32>
    %85 = vector.broadcast %84 : vector<1x128xf32> to vector<64x128xf32>
    %86 = arith.mulf %85, %59 : vector<64x128xf32>
    %c2_53 = arith.constant 2 : index
    %c0_54 = arith.constant 0 : index
    %87 = vector.load %arg4[%c2_53, %c0_54] : memref<10x128xf32, #tpu.memory_space<vmem>>, vector<1x128xf32>
    %88 = vector.broadcast %87 : vector<1x128xf32> to vector<64x128xf32>
    %89 = arith.addf %86, %88 : vector<64x128xf32>
    %90 = math.tanh %89 : vector<64x128xf32>
    %c2_55 = arith.constant 2 : index
    %c0_56 = arith.constant 0 : index
    %91 = vector.load %arg5[%c2_55, %c0_56] : memref<10x128xf32, #tpu.memory_space<vmem>>, vector<1x128xf32>
    %92 = vector.broadcast %91 : vector<1x128xf32> to vector<64x128xf32>
    %93 = arith.mulf %92, %90 : vector<64x128xf32>
    %94 = arith.addf %72, %93 : vector<64x128xf32>
    %c3_57 = arith.constant 3 : index
    %c0_58 = arith.constant 0 : index
    %95 = vector.load %arg3[%c3_57, %c0_58] : memref<10x128xf32, #tpu.memory_space<vmem>>, vector<1x128xf32>
    %96 = vector.broadcast %95 : vector<1x128xf32> to vector<64x128xf32>
    %97 = arith.mulf %96, %59 : vector<64x128xf32>
    %c3_59 = arith.constant 3 : index
    %c0_60 = arith.constant 0 : index
    %98 = vector.load %arg4[%c3_59, %c0_60] : memref<10x128xf32, #tpu.memory_space<vmem>>, vector<1x128xf32>
    %99 = vector.broadcast %98 : vector<1x128xf32> to vector<64x128xf32>
    %100 = arith.addf %97, %99 : vector<64x128xf32>
    %101 = math.tanh %100 : vector<64x128xf32>
    %c3_61 = arith.constant 3 : index
    %c0_62 = arith.constant 0 : index
    %102 = vector.load %arg5[%c3_61, %c0_62] : memref<10x128xf32, #tpu.memory_space<vmem>>, vector<1x128xf32>
    %103 = vector.broadcast %102 : vector<1x128xf32> to vector<64x128xf32>
    %104 = arith.mulf %103, %101 : vector<64x128xf32>
    %105 = arith.addf %83, %104 : vector<64x128xf32>
    %c4_63 = arith.constant 4 : index
    %c0_64 = arith.constant 0 : index
    %106 = vector.load %arg3[%c4_63, %c0_64] : memref<10x128xf32, #tpu.memory_space<vmem>>, vector<1x128xf32>
    %107 = vector.broadcast %106 : vector<1x128xf32> to vector<64x128xf32>
    %108 = arith.mulf %107, %59 : vector<64x128xf32>
    %c4_65 = arith.constant 4 : index
    %c0_66 = arith.constant 0 : index
    %109 = vector.load %arg4[%c4_65, %c0_66] : memref<10x128xf32, #tpu.memory_space<vmem>>, vector<1x128xf32>
    %110 = vector.broadcast %109 : vector<1x128xf32> to vector<64x128xf32>
    %111 = arith.addf %108, %110 : vector<64x128xf32>
    %112 = math.tanh %111 : vector<64x128xf32>
    %c4_67 = arith.constant 4 : index
    %c0_68 = arith.constant 0 : index
    %113 = vector.load %arg5[%c4_67, %c0_68] : memref<10x128xf32, #tpu.memory_space<vmem>>, vector<1x128xf32>
    %114 = vector.broadcast %113 : vector<1x128xf32> to vector<64x128xf32>
    %115 = arith.mulf %114, %112 : vector<64x128xf32>
    %116 = arith.addf %94, %115 : vector<64x128xf32>
    %c5_69 = arith.constant 5 : index
    %c0_70 = arith.constant 0 : index
    %117 = vector.load %arg3[%c5_69, %c0_70] : memref<10x128xf32, #tpu.memory_space<vmem>>, vector<1x128xf32>
    %118 = vector.broadcast %117 : vector<1x128xf32> to vector<64x128xf32>
    %119 = arith.mulf %118, %59 : vector<64x128xf32>
    %c5_71 = arith.constant 5 : index
    %c0_72 = arith.constant 0 : index
    %120 = vector.load %arg4[%c5_71, %c0_72] : memref<10x128xf32, #tpu.memory_space<vmem>>, vector<1x128xf32>
    %121 = vector.broadcast %120 : vector<1x128xf32> to vector<64x128xf32>
    %122 = arith.addf %119, %121 : vector<64x128xf32>
    %123 = math.tanh %122 : vector<64x128xf32>
    %c5_73 = arith.constant 5 : index
    %c0_74 = arith.constant 0 : index
    %124 = vector.load %arg5[%c5_73, %c0_74] : memref<10x128xf32, #tpu.memory_space<vmem>>, vector<1x128xf32>
    %125 = vector.broadcast %124 : vector<1x128xf32> to vector<64x128xf32>
    %126 = arith.mulf %125, %123 : vector<64x128xf32>
    %127 = arith.addf %105, %126 : vector<64x128xf32>
    %c6 = arith.constant 6 : index
    %c0_75 = arith.constant 0 : index
    %128 = vector.load %arg3[%c6, %c0_75] : memref<10x128xf32, #tpu.memory_space<vmem>>, vector<1x128xf32>
    %129 = vector.broadcast %128 : vector<1x128xf32> to vector<64x128xf32>
    %130 = arith.mulf %129, %59 : vector<64x128xf32>
    %c6_76 = arith.constant 6 : index
    %c0_77 = arith.constant 0 : index
    %131 = vector.load %arg4[%c6_76, %c0_77] : memref<10x128xf32, #tpu.memory_space<vmem>>, vector<1x128xf32>
    %132 = vector.broadcast %131 : vector<1x128xf32> to vector<64x128xf32>
    %133 = arith.addf %130, %132 : vector<64x128xf32>
    %134 = math.tanh %133 : vector<64x128xf32>
    %c6_78 = arith.constant 6 : index
    %c0_79 = arith.constant 0 : index
    %135 = vector.load %arg5[%c6_78, %c0_79] : memref<10x128xf32, #tpu.memory_space<vmem>>, vector<1x128xf32>
    %136 = vector.broadcast %135 : vector<1x128xf32> to vector<64x128xf32>
    %137 = arith.mulf %136, %134 : vector<64x128xf32>
    %138 = arith.addf %116, %137 : vector<64x128xf32>
    %c7 = arith.constant 7 : index
    %c0_80 = arith.constant 0 : index
    %139 = vector.load %arg3[%c7, %c0_80] : memref<10x128xf32, #tpu.memory_space<vmem>>, vector<1x128xf32>
    %140 = vector.broadcast %139 : vector<1x128xf32> to vector<64x128xf32>
    %141 = arith.mulf %140, %59 : vector<64x128xf32>
    %c7_81 = arith.constant 7 : index
    %c0_82 = arith.constant 0 : index
    %142 = vector.load %arg4[%c7_81, %c0_82] : memref<10x128xf32, #tpu.memory_space<vmem>>, vector<1x128xf32>
    %143 = vector.broadcast %142 : vector<1x128xf32> to vector<64x128xf32>
    %144 = arith.addf %141, %143 : vector<64x128xf32>
    %145 = math.tanh %144 : vector<64x128xf32>
    %c7_83 = arith.constant 7 : index
    %c0_84 = arith.constant 0 : index
    %146 = vector.load %arg5[%c7_83, %c0_84] : memref<10x128xf32, #tpu.memory_space<vmem>>, vector<1x128xf32>
    %147 = vector.broadcast %146 : vector<1x128xf32> to vector<64x128xf32>
    %148 = arith.mulf %147, %145 : vector<64x128xf32>
    %149 = arith.addf %127, %148 : vector<64x128xf32>
    %c8 = arith.constant 8 : index
    %c0_85 = arith.constant 0 : index
    %150 = vector.load %arg3[%c8, %c0_85] : memref<10x128xf32, #tpu.memory_space<vmem>>, vector<1x128xf32>
    %151 = vector.broadcast %150 : vector<1x128xf32> to vector<64x128xf32>
    %152 = arith.mulf %151, %59 : vector<64x128xf32>
    %c8_86 = arith.constant 8 : index
    %c0_87 = arith.constant 0 : index
    %153 = vector.load %arg4[%c8_86, %c0_87] : memref<10x128xf32, #tpu.memory_space<vmem>>, vector<1x128xf32>
    %154 = vector.broadcast %153 : vector<1x128xf32> to vector<64x128xf32>
    %155 = arith.addf %152, %154 : vector<64x128xf32>
    %156 = math.tanh %155 : vector<64x128xf32>
    %c8_88 = arith.constant 8 : index
    %c0_89 = arith.constant 0 : index
    %157 = vector.load %arg5[%c8_88, %c0_89] : memref<10x128xf32, #tpu.memory_space<vmem>>, vector<1x128xf32>
    %158 = vector.broadcast %157 : vector<1x128xf32> to vector<64x128xf32>
    %159 = arith.mulf %158, %156 : vector<64x128xf32>
    %160 = arith.addf %138, %159 : vector<64x128xf32>
    %c9 = arith.constant 9 : index
    %c0_90 = arith.constant 0 : index
    %161 = vector.load %arg3[%c9, %c0_90] : memref<10x128xf32, #tpu.memory_space<vmem>>, vector<1x128xf32>
    %162 = vector.broadcast %161 : vector<1x128xf32> to vector<64x128xf32>
    %163 = arith.mulf %162, %59 : vector<64x128xf32>
    %c9_91 = arith.constant 9 : index
    %c0_92 = arith.constant 0 : index
    %164 = vector.load %arg4[%c9_91, %c0_92] : memref<10x128xf32, #tpu.memory_space<vmem>>, vector<1x128xf32>
    %165 = vector.broadcast %164 : vector<1x128xf32> to vector<64x128xf32>
    %166 = arith.addf %163, %165 : vector<64x128xf32>
    %167 = math.tanh %166 : vector<64x128xf32>
    %c9_93 = arith.constant 9 : index
    %c0_94 = arith.constant 0 : index
    %168 = vector.load %arg5[%c9_93, %c0_94] : memref<10x128xf32, #tpu.memory_space<vmem>>, vector<1x128xf32>
    %169 = vector.broadcast %168 : vector<1x128xf32> to vector<64x128xf32>
    %170 = arith.mulf %169, %167 : vector<64x128xf32>
    %171 = arith.addf %149, %170 : vector<64x128xf32>
    %172 = arith.addf %160, %171 : vector<64x128xf32>
    %c0_95 = arith.constant 0 : index
    %c0_96 = arith.constant 0 : index
    %173 = vector.load %arg6[%c0_95, %c0_96] : memref<1x128xf32, #tpu.memory_space<vmem>>, vector<1x128xf32>
    %174 = vector.broadcast %173 : vector<1x128xf32> to vector<64x128xf32>
    %175 = arith.addf %172, %174 : vector<64x128xf32>
    %cst_97 = arith.constant 0.000000e+00 : f32
    %176 = vector.broadcast %cst_97 : f32 to vector<64x128xf32>
    %cst_98 = arith.constant 0.000000e+00 : f32
    %177 = vector.broadcast %cst_98 : f32 to vector<1x128xf32>
    %178 = vector.extract_strided_slice %175 {offsets = [0, 0], sizes = [63, 128], strides = [1, 1]} : vector<64x128xf32> to vector<63x128xf32>
    %179 = tpu.concatenate %177, %178 in 0 : vector<1x128xf32>, vector<63x128xf32> -> vector<64x128xf32>
    %c0_99 = arith.constant 0 : index
    %c0_100 = arith.constant 0 : index
    %180 = vector.load %arg7[%c0_99, %c0_100] : memref<4x128xf32, #tpu.memory_space<vmem>>, vector<1x128xf32>
    %181 = vector.broadcast %180 : vector<1x128xf32> to vector<64x128xf32>
    %182 = arith.mulf %181, %179 : vector<64x128xf32>
    %183 = arith.addf %176, %182 : vector<64x128xf32>
    %cst_101 = arith.constant 0.000000e+00 : f32
    %184 = vector.broadcast %cst_101 : f32 to vector<2x128xf32>
    %185 = vector.extract_strided_slice %175 {offsets = [0, 0], sizes = [62, 128], strides = [1, 1]} : vector<64x128xf32> to vector<62x128xf32>
    %186 = tpu.concatenate %184, %185 in 0 : vector<2x128xf32>, vector<62x128xf32> -> vector<64x128xf32>
    %c1_102 = arith.constant 1 : index
    %c0_103 = arith.constant 0 : index
    %187 = vector.load %arg7[%c1_102, %c0_103] : memref<4x128xf32, #tpu.memory_space<vmem>>, vector<1x128xf32>
    %188 = vector.broadcast %187 : vector<1x128xf32> to vector<64x128xf32>
    %189 = arith.mulf %188, %186 : vector<64x128xf32>
    %190 = arith.addf %183, %189 : vector<64x128xf32>
    %cst_104 = arith.constant 0.000000e+00 : f32
    %191 = vector.broadcast %cst_104 : f32 to vector<3x128xf32>
    %192 = vector.extract_strided_slice %175 {offsets = [0, 0], sizes = [61, 128], strides = [1, 1]} : vector<64x128xf32> to vector<61x128xf32>
    %193 = tpu.concatenate %191, %192 in 0 : vector<3x128xf32>, vector<61x128xf32> -> vector<64x128xf32>
    %c2_105 = arith.constant 2 : index
    %c0_106 = arith.constant 0 : index
    %194 = vector.load %arg7[%c2_105, %c0_106] : memref<4x128xf32, #tpu.memory_space<vmem>>, vector<1x128xf32>
    %195 = vector.broadcast %194 : vector<1x128xf32> to vector<64x128xf32>
    %196 = arith.mulf %195, %193 : vector<64x128xf32>
    %197 = arith.addf %190, %196 : vector<64x128xf32>
    %cst_107 = arith.constant 0.000000e+00 : f32
    %198 = vector.broadcast %cst_107 : f32 to vector<4x128xf32>
    %199 = vector.extract_strided_slice %175 {offsets = [0, 0], sizes = [60, 128], strides = [1, 1]} : vector<64x128xf32> to vector<60x128xf32>
    %200 = tpu.concatenate %198, %199 in 0 : vector<4x128xf32>, vector<60x128xf32> -> vector<64x128xf32>
    %c3_108 = arith.constant 3 : index
    %c0_109 = arith.constant 0 : index
    %201 = vector.load %arg7[%c3_108, %c0_109] : memref<4x128xf32, #tpu.memory_space<vmem>>, vector<1x128xf32>
    %202 = vector.broadcast %201 : vector<1x128xf32> to vector<64x128xf32>
    %203 = arith.mulf %202, %200 : vector<64x128xf32>
    %204 = arith.addf %197, %203 : vector<64x128xf32>
    %c0_110 = arith.constant 0 : index
    %c0_111 = arith.constant 0 : index
    %205 = vector.load %arg11[%c0_110, %c0_111] : memref<64x128xf32, #tpu.memory_space<vmem>>, vector<64x128xf32>
    tpu.vector_store %arg11[%c0_110, %c0_111], %204 {strides = array<i32>} : memref<64x128xf32, #tpu.memory_space<vmem>>, vector<64x128xf32>,
    %c0_112 = arith.constant 0 : index
    %c0_113 = arith.constant 0 : index
    %206 = vector.load %arg8[%c0_112, %c0_113] : memref<4x128xf32, #tpu.memory_space<vmem>>, vector<1x128xf32>
    %c1_114 = arith.constant 1 : index
    %c0_115 = arith.constant 0 : index
    %207 = vector.load %arg8[%c1_114, %c0_115] : memref<4x128xf32, #tpu.memory_space<vmem>>, vector<1x128xf32>
    %c2_116 = arith.constant 2 : index
    %c0_117 = arith.constant 0 : index
    %208 = vector.load %arg8[%c2_116, %c0_117] : memref<4x128xf32, #tpu.memory_space<vmem>>, vector<1x128xf32>
    %c3_118 = arith.constant 3 : index
    %c0_119 = arith.constant 0 : index
    %209 = vector.load %arg8[%c3_118, %c0_119] : memref<4x128xf32, #tpu.memory_space<vmem>>, vector<1x128xf32>
    %cst_120 = arith.constant 0.000000e+00 : f32
    %210 = vector.broadcast %cst_120 : f32 to vector<1x128xf32>
    %cst_121 = arith.constant 0.000000e+00 : f32
    %211 = vector.broadcast %cst_121 : f32 to vector<1x128xf32>
    %cst_122 = arith.constant 0.000000e+00 : f32
    %212 = vector.broadcast %cst_122 : f32 to vector<1x128xf32>
    %cst_123 = arith.constant 0.000000e+00 : f32
    %213 = vector.broadcast %cst_123 : f32 to vector<1x128xf32>
    %c0_i32_124 = arith.constant 0 : i32
    %c8_i32_125 = arith.constant 8 : i32
    %214 = arith.addi %c0_i32_124, %c8_i32_125 : i32
    %c1_i32_126 = arith.constant 1 : i32
    %215:4 = scf.for %arg12 = %c0_i32_124 to %214 step %c1_i32_126 iter_args(%arg13 = %210, %arg14 = %211, %arg15 = %212, %arg16 = %213) -> (vector<1x128xf32>, vector<1x128xf32>, vector<1x128xf32>, vector<1x128xf32>)  : i32 {
      %c8_i32_128 = arith.constant 8 : i32
      %216 = arith.muli %arg12, %c8_i32_128 : i32
      %217 = tpu.assume_multiple %216, 8 : i32
      %218 = arith.index_cast %217 : i32 to index
      %c0_129 = arith.constant 0 : index
      %219 = vector.load %arg11[%218, %c0_129] : memref<64x128xf32, #tpu.memory_space<vmem>>, vector<8x128xf32>
      %220 = arith.mulf %206, %arg13 : vector<1x128xf32>
      %221 = arith.mulf %207, %arg14 : vector<1x128xf32>
      %222 = arith.mulf %208, %arg15 : vector<1x128xf32>
      %223 = arith.mulf %209, %arg16 : vector<1x128xf32>
      %224 = arith.addf %220, %221 : vector<1x128xf32>
      %225 = arith.addf %222, %223 : vector<1x128xf32>
      %226 = arith.addf %224, %225 : vector<1x128xf32>
      %227 = vector.extract_strided_slice %219 {offsets = [0, 0], sizes = [1, 128], strides = [1, 1]} : vector<8x128xf32> to vector<1x128xf32>
      %228 = arith.subf %227, %226 : vector<1x128xf32>
      %229 = arith.mulf %206, %228 : vector<1x128xf32>
      %230 = arith.mulf %207, %arg13 : vector<1x128xf32>
      %231 = arith.mulf %208, %arg14 : vector<1x128xf32>
      %232 = arith.mulf %209, %arg15 : vector<1x128xf32>
      %233 = arith.addf %229, %230 : vector<1x128xf32>
      %234 = arith.addf %231, %232 : vector<1x128xf32>
      %235 = arith.addf %233, %234 : vector<1x128xf32>
      %236 = vector.extract_strided_slice %219 {offsets = [1, 0], sizes = [1, 128], strides = [1, 1]} : vector<8x128xf32> to vector<1x128xf32>
      %237 = arith.subf %236, %235 : vector<1x128xf32>
      %238 = arith.mulf %206, %237 : vector<1x128xf32>
      %239 = arith.mulf %207, %228 : vector<1x128xf32>
      %240 = arith.mulf %208, %arg13 : vector<1x128xf32>
      %241 = arith.mulf %209, %arg14 : vector<1x128xf32>
      %242 = arith.addf %238, %239 : vector<1x128xf32>
      %243 = arith.addf %240, %241 : vector<1x128xf32>
      %244 = arith.addf %242, %243 : vector<1x128xf32>
      %245 = vector.extract_strided_slice %219 {offsets = [2, 0], sizes = [1, 128], strides = [1, 1]} : vector<8x128xf32> to vector<1x128xf32>
      %246 = arith.subf %245, %244 : vector<1x128xf32>
      %247 = arith.mulf %206, %246 : vector<1x128xf32>
      %248 = arith.mulf %207, %237 : vector<1x128xf32>
      %249 = arith.mulf %208, %228 : vector<1x128xf32>
      %250 = arith.mulf %209, %arg13 : vector<1x128xf32>
      %251 = arith.addf %247, %248 : vector<1x128xf32>
      %252 = arith.addf %249, %250 : vector<1x128xf32>
      %253 = arith.addf %251, %252 : vector<1x128xf32>
      %254 = vector.extract_strided_slice %219 {offsets = [3, 0], sizes = [1, 128], strides = [1, 1]} : vector<8x128xf32> to vector<1x128xf32>
      %255 = arith.subf %254, %253 : vector<1x128xf32>
      %256 = arith.mulf %206, %255 : vector<1x128xf32>
      %257 = arith.mulf %207, %246 : vector<1x128xf32>
      %258 = arith.mulf %208, %237 : vector<1x128xf32>
      %259 = arith.mulf %209, %228 : vector<1x128xf32>
      %260 = arith.addf %256, %257 : vector<1x128xf32>
      %261 = arith.addf %258, %259 : vector<1x128xf32>
      %262 = arith.addf %260, %261 : vector<1x128xf32>
      %263 = vector.extract_strided_slice %219 {offsets = [4, 0], sizes = [1, 128], strides = [1, 1]} : vector<8x128xf32> to vector<1x128xf32>
      %264 = arith.subf %263, %262 : vector<1x128xf32>
      %265 = arith.mulf %206, %264 : vector<1x128xf32>
      %266 = arith.mulf %207, %255 : vector<1x128xf32>
      %267 = arith.mulf %208, %246 : vector<1x128xf32>
      %268 = arith.mulf %209, %237 : vector<1x128xf32>
      %269 = arith.addf %265, %266 : vector<1x128xf32>
      %270 = arith.addf %267, %268 : vector<1x128xf32>
      %271 = arith.addf %269, %270 : vector<1x128xf32>
      %272 = vector.extract_strided_slice %219 {offsets = [5, 0], sizes = [1, 128], strides = [1, 1]} : vector<8x128xf32> to vector<1x128xf32>
      %273 = arith.subf %272, %271 : vector<1x128xf32>
      %274 = arith.mulf %206, %273 : vector<1x128xf32>
      %275 = arith.mulf %207, %264 : vector<1x128xf32>
      %276 = arith.mulf %208, %255 : vector<1x128xf32>
      %277 = arith.mulf %209, %246 : vector<1x128xf32>
      %278 = arith.addf %274, %275 : vector<1x128xf32>
      %279 = arith.addf %276, %277 : vector<1x128xf32>
      %280 = arith.addf %278, %279 : vector<1x128xf32>
      %281 = vector.extract_strided_slice %219 {offsets = [6, 0], sizes = [1, 128], strides = [1, 1]} : vector<8x128xf32> to vector<1x128xf32>
      %282 = arith.subf %281, %280 : vector<1x128xf32>
      %283 = arith.mulf %206, %282 : vector<1x128xf32>
      %284 = arith.mulf %207, %273 : vector<1x128xf32>
      %285 = arith.mulf %208, %264 : vector<1x128xf32>
      %286 = arith.mulf %209, %255 : vector<1x128xf32>
      %287 = arith.addf %283, %284 : vector<1x128xf32>
      %288 = arith.addf %285, %286 : vector<1x128xf32>
      %289 = arith.addf %287, %288 : vector<1x128xf32>
      %290 = vector.extract_strided_slice %219 {offsets = [7, 0], sizes = [1, 128], strides = [1, 1]} : vector<8x128xf32> to vector<1x128xf32>
      %291 = arith.subf %290, %289 : vector<1x128xf32>
      %292 = tpu.concatenate %228, %237, %246, %255, %264, %273, %282, %291 in 0 : vector<1x128xf32>, vector<1x128xf32>, vector<1x128xf32>, vector<1x128xf32>, vector<1x128xf32>, vector<1x128xf32>, vector<1x128xf32>, vector<1x128xf32> -> vector<8x128xf32>
      %293 = arith.index_cast %217 : i32 to index
      %c0_130 = arith.constant 0 : index
      %294 = vector.load %arg10[%293, %c0_130] : memref<64x128xf32, #tpu.memory_space<vmem>>, vector<8x128xf32>
      tpu.vector_store %arg10[%293, %c0_130], %292 {strides = array<i32>} : memref<64x128xf32, #tpu.memory_space<vmem>>, vector<8x128xf32>,
      scf.yield %291, %282, %273, %264 : vector<1x128xf32>, vector<1x128xf32>, vector<1x128xf32>, vector<1x128xf32>
    }
    %c8_i32_127 = arith.constant 8 : i32
    return
  }
}

</mosaic_0001>

<llo_original>
// kernel: tile.9
$region0: #{tile.9}
  %s0 = inlined_call_operand.vmem [shape: f32[64,3,4], index: 0, kind: input, shape index: {}]
  %s1 = inlined_call_operand.vmem [shape: f32[64,12], index: 1, kind: output, shape index: {}]
  $region1: #{tile.9} parent=0
    #allocation0 [shape = 'u8[12288]{0}', space=vmem, size = 0x3000, scoped, tag = 'scoped mem for input reshape']
    %s3 = sshll.u32 1, 4
    %s4 = ssub.s32 %s3, 1
    %s5 = smul.addr 4, 2
    %s6 = scalar_lea.vmem %s0, %s5
    %v7 = vld [vmem:[%s6] sm:%s4]
    %s8 = scalar_lea.vmem [#allocation0], 16
    %9 = vst [vmem:[%s8] sm:%s4] %v7
    %s10 = scalar_lea.vmem %s0, 4
    %v11 = vld [vmem:[%s10] sm:%s4]
    %s12 = scalar_lea.vmem [#allocation0], 8
    %13 = vst [vmem:[%s12] sm:%s4] %v11
    %v14 = vld [vmem:[%s0] sm:%s4]
    %15 = vst [vmem:[#allocation0] sm:%s4] %v14
    %v16 = vld [vmem:[#allocation0] sm:$0xf]
    %vm17 = vcmask 523264
    %18 = vst.msk [vmem:[%s1] sm:$0xf] %vm17, %v16
    %s19 = scalar_lea.vmem [#allocation0], 8
    %v20 = vld [vmem:[%s19] sm:$0xf]
    %vm21 = vcmask 523264
    %s22 = scalar_lea.vmem %s1, 4
    %23 = vst.msk [vmem:[%s22] sm:$0xf] %vm21, %v20
    %s24 = scalar_lea.vmem [#allocation0], 16
    %v25 = vld [vmem:[%s24] sm:$0xf]
    %vm26 = vcmask 523264
    %s27 = scalar_lea.vmem %s1, 8
    %28 = vst.msk [vmem:[%s27] sm:$0xf] %vm26, %v25

// kernel: parallel_wh_resnet.1
$region0: #{parallel_wh_resnet.1}
  #allocation0 [shape = 'u32[]', space=smem, size = 0x4, offset = 0x4, fixed_abs, tag = 'smem constant byte address 0x4 - core index']
  #allocation1 [shape = 'u32[144,128]{1,0:T(1,128)}', space=vmem, size = 0x12000, scoped, tag = 'internal scratch']
  #allocation2 [shape = 'f32[64,128]{1,0:T(8,128)}', space=vmem, size = 0x8000, scoped, tag = 'scratch operand']
  %s0 = inlined_call_operand.vmem [shape: f32[64,128], index: 0, kind: input, shape index: {}]
  %s1 = inlined_call_operand.vmem [shape: f32[6,128], index: 1, kind: input, shape index: {}]
  %s2 = inlined_call_operand.vmem [shape: f32[6,128], index: 2, kind: input, shape index: {}]
  %s3 = inlined_call_operand.vmem [shape: f32[10,128], index: 3, kind: input, shape index: {}]
  %s4 = inlined_call_operand.vmem [shape: f32[10,128], index: 4, kind: input, shape index: {}]
  %s5 = inlined_call_operand.vmem [shape: f32[10,128], index: 5, kind: input, shape index: {}]
  %s6 = inlined_call_operand.vmem [shape: f32[1,128], index: 6, kind: input, shape index: {}]
  %s7 = inlined_call_operand.vmem [shape: f32[4,128], index: 7, kind: input, shape index: {}]
  %s8 = inlined_call_operand.vmem [shape: f32[4,128], index: 8, kind: input, shape index: {}]
  %s9 = inlined_call_operand.vmem [shape: f32[64,128], index: 9, kind: output, shape index: {0}]
  %s10 = inlined_call_operand.vmem [shape: f32[64,128], index: 10, kind: output, shape index: {1}]
  %11 = xla_tuple %s9, %s10
  %s12 = sld [smem:[#allocation0]]
  $region68: #{parallel_wh_resnet.1} parent=0
    _
  %s14 = ssub.s32 1, %s12
  %s15 = scalar_select 0, %s14, %s12
  // Predicated region
  $region2: #{parallel_wh_resnet.1} parent=0 // pred_check
    _
  $region3: #{parallel_wh_resnet.1} parent=0 // pred_check_branch
    %17 = sbr.rel (0) target = $region5
  $region4: #{parallel_wh_resnet.1} parent=0 // pred_region
    _
  $region5: #{parallel_wh_resnet.1} parent=0 // pred_fallthru
    _
  // Predicated region
  $region6: #{parallel_wh_resnet.1} parent=0 // pred_check
    _
  $region7: #{parallel_wh_resnet.1} parent=0 // pred_check_branch
    %19 = sbr.rel (0) target = $region9
  $region8: #{parallel_wh_resnet.1} parent=0 // pred_region
    _
  $region9: #{parallel_wh_resnet.1} parent=0 // pred_fallthru
    _
  // Predicated region
  $region10: #{parallel_wh_resnet.1} parent=0 // pred_check
    _
  $region11: #{parallel_wh_resnet.1} parent=0 // pred_check_branch
    %21 = sbr.rel (0) target = $region13
  $region12: #{parallel_wh_resnet.1} parent=0 // pred_region
    _
  $region13: #{parallel_wh_resnet.1} parent=0 // pred_fallthru
    _
  // Predicated region
  $region14: #{parallel_wh_resnet.1} parent=0 // pred_check
    _
  $region15: #{parallel_wh_resnet.1} parent=0 // pred_check_branch
    %23 = sbr.rel (0) target = $region17
  $region16: #{parallel_wh_resnet.1} parent=0 // pred_region
    _
  $region17: #{parallel_wh_resnet.1} parent=0 // pred_fallthru
    _
  // Predicated region
  $region18: #{parallel_wh_resnet.1} parent=0 // pred_check
    _
  $region19: #{parallel_wh_resnet.1} parent=0 // pred_check_branch
    %25 = sbr.rel (0) target = $region21
  $region20: #{parallel_wh_resnet.1} parent=0 // pred_region
    _
  $region21: #{parallel_wh_resnet.1} parent=0 // pred_fallthru
    _
  // Predicated region
  $region22: #{parallel_wh_resnet.1} parent=0 // pred_check
    _
  $region23: #{parallel_wh_resnet.1} parent=0 // pred_check_branch
    %27 = sbr.rel (0) target = $region25
  $region24: #{parallel_wh_resnet.1} parent=0 // pred_region
    _
  $region25: #{parallel_wh_resnet.1} parent=0 // pred_fallthru
    _
  // Predicated region
  $region26: #{parallel_wh_resnet.1} parent=0 // pred_check
    _
  $region27: #{parallel_wh_resnet.1} parent=0 // pred_check_branch
    %29 = sbr.rel (0) target = $region29
  $region28: #{parallel_wh_resnet.1} parent=0 // pred_region
    _
  $region29: #{parallel_wh_resnet.1} parent=0 // pred_fallthru
    _
  // Predicated region
  $region30: #{parallel_wh_resnet.1} parent=0 // pred_check
    _
  $region31: #{parallel_wh_resnet.1} parent=0 // pred_check_branch
    %31 = sbr.rel (0) target = $region33
  $region32: #{parallel_wh_resnet.1} parent=0 // pred_region
    _
  $region33: #{parallel_wh_resnet.1} parent=0 // pred_fallthru
    _
  // Predicated region
  $region34: #{parallel_wh_resnet.1} parent=0 // pred_check
    _
  $region35: #{parallel_wh_resnet.1} parent=0 // pred_check_branch
    %33 = sbr.rel (0) target = $region37
  $region36: #{parallel_wh_resnet.1} parent=0 // pred_region
    _
  $region37: #{parallel_wh_resnet.1} parent=0 // pred_fallthru
    _
  %v34 = vld [vmem:[%s0] sm:$0xff]
  %v35 = vld [vmem:[%s0 + $0x8] sm:$0xff]
  %v36 = vld [vmem:[%s0 + $0x10] sm:$0xff]
  %v37 = vld [vmem:[%s0 + $0x18] sm:$0xff]
  %v38 = vld [vmem:[%s0 + $0x20] sm:$0xff]
  %v39 = vld [vmem:[%s0 + $0x28] sm:$0xff]
  %v40 = vld [vmem:[%s0 + $0x30] sm:$0xff]
  %v41 = vld [vmem:[%s0 + $0x38] sm:$0xff]
  %vm50 = vcmask 1040384
  %v51 = vrot.slane %v34, 7
  %v52 = vrot.slane %v35, 7
  %v53 = vsel %vm50, %v51, %v52
  %v54 = vrot.slane %v36, 7
  %v55 = vsel %vm50, %v52, %v54
  %v56 = vrot.slane %v37, 7
  %v57 = vsel %vm50, %v54, %v56
  %v58 = vrot.slane %v38, 7
  %v59 = vsel %vm50, %v56, %v58
  %v60 = vrot.slane %v39, 7
  %v61 = vsel %vm50, %v58, %v60
  %v62 = vrot.slane %v40, 7
  %v63 = vsel %vm50, %v60, %v62
  %v64 = vrot.slane %v41, 7
  %v65 = vsel %vm50, %v62, %v64
  %v74 = vsel %vm50, 0.0, %v51
  %v75 = vld [vmem:[%s1] sm:$0x1]
  %v76 = vlaneseq
  %v77 = vshrl.u32 %v76, 7
  %v78 = vsub.s32 0, %v77
  %v79 = vrot.slane %v75, %v78
  %v80 = vmul.f32 %v79, %v74
  %v81 = vmul.f32 %v79, %v53
  %v82 = vmul.f32 %v79, %v55
  %v83 = vmul.f32 %v79, %v57
  %v84 = vmul.f32 %v79, %v59
  %v85 = vmul.f32 %v79, %v61
  %v86 = vmul.f32 %v79, %v63
  %v87 = vmul.f32 %v79, %v65
  %v88 = vadd.f32 %v80, 0.0
  %v89 = vadd.f32 %v81, 0.0
  %v90 = vadd.f32 %v82, 0.0
  %v91 = vadd.f32 %v83, 0.0
  %v92 = vadd.f32 %v84, 0.0
  %v93 = vadd.f32 %v85, 0.0
  %v94 = vadd.f32 %v86, 0.0
  %v95 = vadd.f32 %v87, 0.0
  %vm96 = vcmask 1041408
  %v97 = vrot.slane %v34, 6
  %v98 = vrot.slane %v35, 6
  %v99 = vsel %vm96, %v97, %v98
  %v100 = vrot.slane %v36, 6
  %v101 = vsel %vm96, %v98, %v100
  %v102 = vrot.slane %v37, 6
  %v103 = vsel %vm96, %v100, %v102
  %v104 = vrot.slane %v38, 6
  %v105 = vsel %vm96, %v102, %v104
  %v106 = vrot.slane %v39, 6
  %v107 = vsel %vm96, %v104, %v106
  %v108 = vrot.slane %v40, 6
  %v109 = vsel %vm96, %v106, %v108
  %v110 = vrot.slane %v41, 6
  %v111 = vsel %vm96, %v108, %v110
  %v120 = vsel %vm96, 0.0, %v97
  %v121 = vld [vmem:[%s1 + $0x1] sm:$0x1]
  %v122 = vlaneseq
  %v123 = vshrl.u32 %v122, 7
  %v124 = vsub.s32 0, %v123
  %v125 = vrot.slane %v121, %v124
  %v126 = vmul.f32 %v125, %v120
  %v127 = vmul.f32 %v125, %v99
  %v128 = vmul.f32 %v125, %v101
  %v129 = vmul.f32 %v125, %v103
  %v130 = vmul.f32 %v125, %v105
  %v131 = vmul.f32 %v125, %v107
  %v132 = vmul.f32 %v125, %v109
  %v133 = vmul.f32 %v125, %v111
  %v134 = vadd.f32 %v88, %v126
  %v135 = vadd.f32 %v89, %v127
  %v136 = vadd.f32 %v90, %v128
  %v137 = vadd.f32 %v91, %v129
  %v138 = vadd.f32 %v92, %v130
  %v139 = vadd.f32 %v93, %v131
  %v140 = vadd.f32 %v94, %v132
  %v141 = vadd.f32 %v95, %v133
  %vm142 = vcmask 1042432
  %v143 = vrot.slane %v34, 5
  %v144 = vrot.slane %v35, 5
  %v145 = vsel %vm142, %v143, %v144
  %v146 = vrot.slane %v36, 5
  %v147 = vsel %vm142, %v144, %v146
  %v148 = vrot.slane %v37, 5
  %v149 = vsel %vm142, %v146, %v148
  %v150 = vrot.slane %v38, 5
  %v151 = vsel %vm142, %v148, %v150
  %v152 = vrot.slane %v39, 5
  %v153 = vsel %vm142, %v150, %v152
  %v154 = vrot.slane %v40, 5
  %v155 = vsel %vm142, %v152, %v154
  %v156 = vrot.slane %v41, 5
  %v157 = vsel %vm142, %v154, %v156
  %v166 = vsel %vm142, 0.0, %v143
  %v167 = vld [vmem:[%s1 + $0x2] sm:$0x1]
  %v168 = vlaneseq
  %v169 = vshrl.u32 %v168, 7
  %v170 = vsub.s32 0, %v169
  %v171 = vrot.slane %v167, %v170
  %v172 = vmul.f32 %v171, %v166
  %v173 = vmul.f32 %v171, %v145
  %v174 = vmul.f32 %v171, %v147
  %v175 = vmul.f32 %v171, %v149
  %v176 = vmul.f32 %v171, %v151
  %v177 = vmul.f32 %v171, %v153
  %v178 = vmul.f32 %v171, %v155
  %v179 = vmul.f32 %v171, %v157
  %v180 = vadd.f32 %v134, %v172
  %v181 = vadd.f32 %v135, %v173
  %v182 = vadd.f32 %v136, %v174
  %v183 = vadd.f32 %v137, %v175
  %v184 = vadd.f32 %v138, %v176
  %v185 = vadd.f32 %v139, %v177
  %v186 = vadd.f32 %v140, %v178
  %v187 = vadd.f32 %v141, %v179
  %vm188 = vcmask 1043456
  %v189 = vrot.slane %v34, 4
  %v190 = vrot.slane %v35, 4
  %v191 = vsel %vm188, %v189, %v190
  %v192 = vrot.slane %v36, 4
  %v193 = vsel %vm188, %v190, %v192
  %v194 = vrot.slane %v37, 4
  %v195 = vsel %vm188, %v192, %v194
  %v196 = vrot.slane %v38, 4
  %v197 = vsel %vm188, %v194, %v196
  %v198 = vrot.slane %v39, 4
  %v199 = vsel %vm188, %v196, %v198
  %v200 = vrot.slane %v40, 4
  %v201 = vsel %vm188, %v198, %v200
  %v202 = vrot.slane %v41, 4
  %v203 = vsel %vm188, %v200, %v202
  %v212 = vsel %vm188, 0.0, %v189
  %v213 = vld [vmem:[%s1 + $0x3] sm:$0x1]
  %v214 = vlaneseq
  %v215 = vshrl.u32 %v214, 7
  %v216 = vsub.s32 0, %v215
  %v217 = vrot.slane %v213, %v216
  %v218 = vmul.f32 %v217, %v212
  %v219 = vmul.f32 %v217, %v191
  %v220 = vmul.f32 %v217, %v193
  %v221 = vmul.f32 %v217, %v195
  %v222 = vmul.f32 %v217, %v197
  %v223 = vmul.f32 %v217, %v199
  %v224 = vmul.f32 %v217, %v201
  %v225 = vmul.f32 %v217, %v203
  %v226 = vadd.f32 %v180, %v218
  %v227 = vadd.f32 %v181, %v219
  %v228 = vadd.f32 %v182, %v220
  %v229 = vadd.f32 %v183, %v221
  %v230 = vadd.f32 %v184, %v222
  %v231 = vadd.f32 %v185, %v223
  %v232 = vadd.f32 %v186, %v224
  %v233 = vadd.f32 %v187, %v225
  %vm234 = vcmask 1044480
  %v235 = vrot.slane %v34, 3
  %v236 = vrot.slane %v35, 3
  %v237 = vsel %vm234, %v235, %v236
  %v238 = vrot.slane %v36, 3
  %v239 = vsel %vm234, %v236, %v238
  %v240 = vrot.slane %v37, 3
  %v241 = vsel %vm234, %v238, %v240
  %v242 = vrot.slane %v38, 3
  %v243 = vsel %vm234, %v240, %v242
  %v244 = vrot.slane %v39, 3
  %v245 = vsel %vm234, %v242, %v244
  %v246 = vrot.slane %v40, 3
  %v247 = vsel %vm234, %v244, %v246
  %v248 = vrot.slane %v41, 3
  %v249 = vsel %vm234, %v246, %v248
  %v258 = vsel %vm234, 0.0, %v235
  %v259 = vld [vmem:[%s1 + $0x4] sm:$0x1]
  %v260 = vlaneseq
  %v261 = vshrl.u32 %v260, 7
  %v262 = vsub.s32 0, %v261
  %v263 = vrot.slane %v259, %v262
  %v264 = vmul.f32 %v263, %v258
  %v265 = vmul.f32 %v263, %v237
  %v266 = vmul.f32 %v263, %v239
  %v267 = vmul.f32 %v263, %v241
  %v268 = vmul.f32 %v263, %v243
  %v269 = vmul.f32 %v263, %v245
  %v270 = vmul.f32 %v263, %v247
  %v271 = vmul.f32 %v263, %v249
  %v272 = vadd.f32 %v226, %v264
  %v273 = vadd.f32 %v227, %v265
  %v274 = vadd.f32 %v228, %v266
  %v275 = vadd.f32 %v229, %v267
  %v276 = vadd.f32 %v230, %v268
  %v277 = vadd.f32 %v231, %v269
  %v278 = vadd.f32 %v232, %v270
  %v279 = vadd.f32 %v233, %v271
  %vm280 = vcmask 1045504
  %v281 = vrot.slane %v34, 2
  %v282 = vrot.slane %v35, 2
  %v283 = vsel %vm280, %v281, %v282
  %v284 = vrot.slane %v36, 2
  %v285 = vsel %vm280, %v282, %v284
  %v286 = vrot.slane %v37, 2
  %v287 = vsel %vm280, %v284, %v286
  %v288 = vrot.slane %v38, 2
  %v289 = vsel %vm280, %v286, %v288
  %v290 = vrot.slane %v39, 2
  %v291 = vsel %vm280, %v288, %v290
  %v292 = vrot.slane %v40, 2
  %v293 = vsel %vm280, %v290, %v292
  %v294 = vrot.slane %v41, 2
  %v295 = vsel %vm280, %v292, %v294
  %v304 = vsel %vm280, 0.0, %v281
  %v305 = vld [vmem:[%s1 + $0x5] sm:$0x1]
  %v306 = vlaneseq
  %v307 = vshrl.u32 %v306, 7
  %v308 = vsub.s32 0, %v307
  %v309 = vrot.slane %v305, %v308
  %v310 = vmul.f32 %v309, %v304
  %v311 = vmul.f32 %v309, %v283
  %v312 = vmul.f32 %v309, %v285
  %v313 = vmul.f32 %v309, %v287
  %v314 = vmul.f32 %v309, %v289
  %v315 = vmul.f32 %v309, %v291
  %v316 = vmul.f32 %v309, %v293
  %v317 = vmul.f32 %v309, %v295
  %v318 = vadd.f32 %v272, %v310
  %v319 = vadd.f32 %v273, %v311
  %v320 = vadd.f32 %v274, %v312
  %v321 = vadd.f32 %v275, %v313
  %v322 = vadd.f32 %v276, %v314
  %v323 = vadd.f32 %v277, %v315
  %v324 = vadd.f32 %v278, %v316
  %v325 = vadd.f32 %v279, %v317
  %326 = vst [vmem:[#allocation2] sm:$0xff] %v318
  %327 = vst [vmem:[#allocation2 + $0x8] sm:$0xff] %v319
  %328 = vst [vmem:[#allocation2 + $0x10] sm:$0xff] %v320
  %329 = vst [vmem:[#allocation2 + $0x18] sm:$0xff] %v321
  %330 = vst [vmem:[#allocation2 + $0x20] sm:$0xff] %v322
  %331 = vst [vmem:[#allocation2 + $0x28] sm:$0xff] %v323
  %332 = vst [vmem:[#allocation2 + $0x30] sm:$0xff] %v324
  %333 = vst [vmem:[#allocation2 + $0x38] sm:$0xff] %v325
  %v334 = vld [vmem:[%s2] sm:$0x1]
  %v335 = vld [vmem:[%s2 + $0x1] sm:$0x1]
  %v336 = vld [vmem:[%s2 + $0x2] sm:$0x1]
  %v337 = vld [vmem:[%s2 + $0x3] sm:$0x1]
  %v338 = vld [vmem:[%s2 + $0x4] sm:$0x1]
  %v339 = vld [vmem:[%s2 + $0x5] sm:$0x1]
  loop: start=0, step=1, limit=8
  $region38: #{parallel_wh_resnet.1} parent=0 // loop_pre_header
    _
  $region39: #{parallel_wh_resnet.1} parent=0 // loop_header
    %s341 = sphi 0, %s345
    %p342 = scmp.ge.s32.totalorder %s341, 8
    %v346 = vphi 0.0, %v507
    %v347 = vphi 0.0, %v489
    %v348 = vphi 0.0, %v471
    %v349 = vphi 0.0, %v453
    %v350 = vphi 0.0, %v435
    %v351 = vphi 0.0, %v417
  $region40: #{parallel_wh_resnet.1} parent=0 // loop_header_branch
    %344 = sbr.rel (%p342) target = $region44
  $region41: #{parallel_wh_resnet.1} parent=0 // loop_body
    %s352 = smul.u32 %s341, 8
    %s353 = scalar_lea.vmem [#allocation2], %s352
    %v354 = vld [vmem:[%s353] sm:$0xff]
    %v356 = vrot.slane %v346, 7
    %v358 = vmul.f32 %v334, %v356
    %v360 = vrot.slane %v347, 6
    %v362 = vmul.f32 %v335, %v360
    %v364 = vrot.slane %v348, 5
    %v366 = vmul.f32 %v336, %v364
    %v368 = vrot.slane %v349, 4
    %v370 = vmul.f32 %v337, %v368
    %v372 = vrot.slane %v350, 3
    %v374 = vmul.f32 %v338, %v372
    %v376 = vrot.slane %v351, 2
    %v378 = vmul.f32 %v339, %v376
    %v379 = vadd.f32 %v358, %v362
    %v380 = vadd.f32 %v366, %v370
    %v381 = vadd.f32 %v374, %v378
    %v382 = vadd.f32 %v379, %v380
    %v383 = vadd.f32 %v382, %v381
    %v384 = vsub.f32 %v354, %v383
    %v385 = vmul.f32 %v334, %v384
    %v386 = vmul.f32 %v335, %v356
    %v387 = vmul.f32 %v336, %v360
    %v388 = vmul.f32 %v337, %v364
    %v389 = vmul.f32 %v338, %v368
    %v390 = vmul.f32 %v339, %v372
    %v391 = vadd.f32 %v385, %v386
    %v392 = vadd.f32 %v387, %v388
    %v393 = vadd.f32 %v389, %v390
    %v394 = vadd.f32 %v391, %v392
    %v395 = vadd.f32 %v394, %v393
    %v397 = vrot.slane %v395, 7
    %v399 = vsub.f32 %v354, %v397
    %v401 = vrot.slane %v399, 1
    %v403 = vmul.f32 %v334, %v401
    %v404 = vmul.f32 %v335, %v384
    %v405 = vmul.f32 %v336, %v356
    %v406 = vmul.f32 %v337, %v360
    %v407 = vmul.f32 %v338, %v364
    %v408 = vmul.f32 %v339, %v368
    %v409 = vadd.f32 %v403, %v404
    %v410 = vadd.f32 %v405, %v406
    %v411 = vadd.f32 %v407, %v408
    %v412 = vadd.f32 %v409, %v410
    %v413 = vadd.f32 %v412, %v411
    %v415 = vrot.slane %v413, 6
    %v417 = vsub.f32 %v354, %v415
    %v419 = vrot.slane %v417, 2
    %v421 = vmul.f32 %v334, %v419
    %v422 = vmul.f32 %v335, %v401
    %v423 = vmul.f32 %v336, %v384
    %v424 = vmul.f32 %v337, %v356
    %v425 = vmul.f32 %v338, %v360
    %v426 = vmul.f32 %v339, %v364
    %v427 = vadd.f32 %v421, %v422
    %v428 = vadd.f32 %v423, %v424
    %v429 = vadd.f32 %v425, %v426
    %v430 = vadd.f32 %v427, %v428
    %v431 = vadd.f32 %v430, %v429
    %v433 = vrot.slane %v431, 5
    %v435 = vsub.f32 %v354, %v433
    %v437 = vrot.slane %v435, 3
    %v439 = vmul.f32 %v334, %v437
    %v440 = vmul.f32 %v335, %v419
    %v441 = vmul.f32 %v336, %v401
    %v442 = vmul.f32 %v337, %v384
    %v443 = vmul.f32 %v338, %v356
    %v444 = vmul.f32 %v339, %v360
    %v445 = vadd.f32 %v439, %v440
    %v446 = vadd.f32 %v441, %v442
    %v447 = vadd.f32 %v443, %v444
    %v448 = vadd.f32 %v445, %v446
    %v449 = vadd.f32 %v448, %v447
    %v451 = vrot.slane %v449, 4
    %v453 = vsub.f32 %v354, %v451
    %v455 = vrot.slane %v453, 4
    %v457 = vmul.f32 %v334, %v455
    %v458 = vmul.f32 %v335, %v437
    %v459 = vmul.f32 %v336, %v419
    %v460 = vmul.f32 %v337, %v401
    %v461 = vmul.f32 %v338, %v384
    %v462 = vmul.f32 %v339, %v356
    %v463 = vadd.f32 %v457, %v458
    %v464 = vadd.f32 %v459, %v460
    %v465 = vadd.f32 %v461, %v462
    %v466 = vadd.f32 %v463, %v464
    %v467 = vadd.f32 %v466, %v465
    %v469 = vrot.slane %v467, 3
    %v471 = vsub.f32 %v354, %v469
    %v473 = vrot.slane %v471, 5
    %v475 = vmul.f32 %v334, %v473
    %v476 = vmul.f32 %v335, %v455
    %v477 = vmul.f32 %v336, %v437
    %v478 = vmul.f32 %v337, %v419
    %v479 = vmul.f32 %v338, %v401
    %v480 = vmul.f32 %v339, %v384
    %v481 = vadd.f32 %v475, %v476
    %v482 = vadd.f32 %v477, %v478
    %v483 = vadd.f32 %v479, %v480
    %v484 = vadd.f32 %v481, %v482
    %v485 = vadd.f32 %v484, %v483
    %v487 = vrot.slane %v485, 2
    %v489 = vsub.f32 %v354, %v487
    %v491 = vrot.slane %v489, 6
    %v493 = vmul.f32 %v334, %v491
    %v494 = vmul.f32 %v335, %v473
    %v495 = vmul.f32 %v336, %v455
    %v496 = vmul.f32 %v337, %v437
    %v497 = vmul.f32 %v338, %v419
    %v498 = vmul.f32 %v339, %v401
    %v499 = vadd.f32 %v493, %v494
    %v500 = vadd.f32 %v495, %v496
    %v501 = vadd.f32 %v497, %v498
    %v502 = vadd.f32 %v499, %v500
    %v503 = vadd.f32 %v502, %v501
    %v505 = vrot.slane %v503, 1
    %v507 = vsub.f32 %v354, %v505
    %v508 = vsel %vm50, %v384, %v399
    %v509 = vsel %vm96, %v508, %v417
    %v510 = vsel %vm142, %v509, %v435
    %v511 = vsel %vm188, %v510, %v453
    %v512 = vsel %vm234, %v511, %v471
    %v513 = vsel %vm280, %v512, %v489
    %vm514 = vcmask 1046528
    %v515 = vsel %vm514, %v513, %v507
    %s516 = scalar_lea.vmem %s9, %s352
    %517 = vst [vmem:[%s516] sm:$0xff] %v515
  $region42: #{parallel_wh_resnet.1} parent=0 // loop_footer
    %s345 = sadd.s32 1, %s341
  $region43: #{parallel_wh_resnet.1} parent=0 // loop_footer_branch
    %340 = sbr.rel target = $region39
  $region44: #{parallel_wh_resnet.1} parent=0 // loop_exit
    _
  %v518 = vld [vmem:[%s9] sm:$0xff]
  %v519 = vld [vmem:[%s9 + $0x8] sm:$0xff]
  %v520 = vld [vmem:[%s9 + $0x10] sm:$0xff]
  %v521 = vld [vmem:[%s9 + $0x18] sm:$0xff]
  %v522 = vld [vmem:[%s9 + $0x20] sm:$0xff]
  %v523 = vld [vmem:[%s9 + $0x28] sm:$0xff]
  %v524 = vld [vmem:[%s9 + $0x30] sm:$0xff]
  %v525 = vld [vmem:[%s9 + $0x38] sm:$0xff]
  %v526 = vld [vmem:[%s3] sm:$0x1]
  %v527 = vlaneseq
  %v528 = vshrl.u32 %v527, 7
  %v529 = vsub.s32 0, %v528
  %v530 = vrot.slane %v526, %v529
  %v531 = vmul.f32 %v530, %v518
  %v532 = vmul.f32 %v530, %v519
  %v533 = vmul.f32 %v530, %v520
  %v534 = vmul.f32 %v530, %v521
  %v535 = vmul.f32 %v530, %v522
  %v536 = vmul.f32 %v530, %v523
  %v537 = vmul.f32 %v530, %v524
  %v538 = vmul.f32 %v530, %v525
  %v539 = vld [vmem:[%s4] sm:$0x1]
  %v540 = vlaneseq
  %v541 = vshrl.u32 %v540, 7
  %v542 = vsub.s32 0, %v541
  %v543 = vrot.slane %v539, %v542
  %v544 = vadd.f32 %v531, %v543
  %v545 = vadd.f32 %v532, %v543
  %v546 = vadd.f32 %v533, %v543
  %v547 = vadd.f32 %v534, %v543
  %v548 = vadd.f32 %v535, %v543
  %v549 = vadd.f32 %v536, %v543
  %v550 = vadd.f32 %v537, %v543
  %v551 = vadd.f32 %v538, %v543
  %v552 = vtanh.pop %v544
  %v553 = vtanh.pop %v545
  %v554 = vtanh.pop %v546
  %v555 = vtanh.pop %v547
  %v556 = vtanh.pop %v548
  %v557 = vtanh.pop %v549
  %v558 = vtanh.pop %v550
  %v559 = vtanh.pop %v551
  %v560 = vld [vmem:[%s5] sm:$0x1]
  %v561 = vlaneseq
  %v562 = vshrl.u32 %v561, 7
  %v563 = vsub.s32 0, %v562
  %v564 = vrot.slane %v560, %v563
  %v565 = vmul.f32 %v564, %v552
  %v566 = vmul.f32 %v564, %v553
  %v567 = vmul.f32 %v564, %v554
  %v568 = vmul.f32 %v564, %v555
  %v569 = vmul.f32 %v564, %v556
  %v570 = vmul.f32 %v564, %v557
  %v571 = vmul.f32 %v564, %v558
  %v572 = vmul.f32 %v564, %v559
  %v573 = vadd.f32 %v565, 0.0
  %v574 = vadd.f32 %v566, 0.0
  %v575 = vadd.f32 %v567, 0.0
  %v576 = vadd.f32 %v568, 0.0
  %v577 = vadd.f32 %v569, 0.0
  %v578 = vadd.f32 %v570, 0.0
  %v579 = vadd.f32 %v571, 0.0
  %v580 = vadd.f32 %v572, 0.0
  %v581 = vld [vmem:[%s3 + $0x1] sm:$0x1]
  %v582 = vlaneseq
  %v583 = vshrl.u32 %v582, 7
  %v584 = vsub.s32 0, %v583
  %v585 = vrot.slane %v581, %v584
  %v586 = vmul.f32 %v585, %v518
  %v587 = vmul.f32 %v585, %v519
  %v588 = vmul.f32 %v585, %v520
  %v589 = vmul.f32 %v585, %v521
  %v590 = vmul.f32 %v585, %v522
  %v591 = vmul.f32 %v585, %v523
  %v592 = vmul.f32 %v585, %v524
  %v593 = vmul.f32 %v585, %v525
  %v594 = vld [vmem:[%s4 + $0x1] sm:$0x1]
  %v595 = vlaneseq
  %v596 = vshrl.u32 %v595, 7
  %v597 = vsub.s32 0, %v596
  %v598 = vrot.slane %v594, %v597
  %v599 = vadd.f32 %v586, %v598
  %v600 = vadd.f32 %v587, %v598
  %v601 = vadd.f32 %v588, %v598
  %v602 = vadd.f32 %v589, %v598
  %v603 = vadd.f32 %v590, %v598
  %v604 = vadd.f32 %v591, %v598
  %v605 = vadd.f32 %v592, %v598
  %v606 = vadd.f32 %v593, %v598
  %v607 = vtanh.pop %v599
  %v608 = vtanh.pop %v600
  %v609 = vtanh.pop %v601
  %v610 = vtanh.pop %v602
  %v611 = vtanh.pop %v603
  %v612 = vtanh.pop %v604
  %v613 = vtanh.pop %v605
  %v614 = vtanh.pop %v606
  %v615 = vld [vmem:[%s5 + $0x1] sm:$0x1]
  %v616 = vlaneseq
  %v617 = vshrl.u32 %v616, 7
  %v618 = vsub.s32 0, %v617
  %v619 = vrot.slane %v615, %v618
  %v620 = vmul.f32 %v619, %v607
  %v621 = vmul.f32 %v619, %v608
  %v622 = vmul.f32 %v619, %v609
  %v623 = vmul.f32 %v619, %v610
  %v624 = vmul.f32 %v619, %v611
  %v625 = vmul.f32 %v619, %v612
  %v626 = vmul.f32 %v619, %v613
  %v627 = vmul.f32 %v619, %v614
  %v628 = vadd.f32 %v620, 0.0
  %v629 = vadd.f32 %v621, 0.0
  %v630 = vadd.f32 %v622, 0.0
  %v631 = vadd.f32 %v623, 0.0
  %v632 = vadd.f32 %v624, 0.0
  %v633 = vadd.f32 %v625, 0.0
  %v634 = vadd.f32 %v626, 0.0
  %v635 = vadd.f32 %v627, 0.0
  %v636 = vld [vmem:[%s3 + $0x2] sm:$0x1]
  %v637 = vlaneseq
  %v638 = vshrl.u32 %v637, 7
  %v639 = vsub.s32 0, %v638
  %v640 = vrot.slane %v636, %v639
  %v641 = vmul.f32 %v640, %v518
  %v642 = vmul.f32 %v640, %v519
  %v643 = vmul.f32 %v640, %v520
  %v644 = vmul.f32 %v640, %v521
  %v645 = vmul.f32 %v640, %v522
  %v646 = vmul.f32 %v640, %v523
  %v647 = vmul.f32 %v640, %v524
  %v648 = vmul.f32 %v640, %v525
  %v649 = vld [vmem:[%s4 + $0x2] sm:$0x1]
  %v650 = vlaneseq
  %v651 = vshrl.u32 %v650, 7
  %v652 = vsub.s32 0, %v651
  %v653 = vrot.slane %v649, %v652
  %v654 = vadd.f32 %v641, %v653
  %v655 = vadd.f32 %v642, %v653
  %v656 = vadd.f32 %v643, %v653
  %v657 = vadd.f32 %v644, %v653
  %v658 = vadd.f32 %v645, %v653
  %v659 = vadd.f32 %v646, %v653
  %v660 = vadd.f32 %v647, %v653
  %v661 = vadd.f32 %v648, %v653
  %v662 = vtanh.pop %v654
  %v663 = vtanh.pop %v655
  %v664 = vtanh.pop %v656
  %v665 = vtanh.pop %v657
  %v666 = vtanh.pop %v658
  %v667 = vtanh.pop %v659
  %v668 = vtanh.pop %v660
  %v669 = vtanh.pop %v661
  %v670 = vld [vmem:[%s5 + $0x2] sm:$0x1]
  %v671 = vlaneseq
  %v672 = vshrl.u32 %v671, 7
  %v673 = vsub.s32 0, %v672
  %v674 = vrot.slane %v670, %v673
  %v675 = vmul.f32 %v674, %v662
  %v676 = vmul.f32 %v674, %v663
  %v677 = vmul.f32 %v674, %v664
  %v678 = vmul.f32 %v674, %v665
  %v679 = vmul.f32 %v674, %v666
  %v680 = vmul.f32 %v674, %v667
  %v681 = vmul.f32 %v674, %v668
  %v682 = vmul.f32 %v674, %v669
  %v683 = vadd.f32 %v573, %v675
  %v684 = vadd.f32 %v574, %v676
  %v685 = vadd.f32 %v575, %v677
  %v686 = vadd.f32 %v576, %v678
  %v687 = vadd.f32 %v577, %v679
  %v688 = vadd.f32 %v578, %v680
  %v689 = vadd.f32 %v579, %v681
  %v690 = vadd.f32 %v580, %v682
  %v691 = vld [vmem:[%s3 + $0x3] sm:$0x1]
  %v692 = vlaneseq
  %v693 = vshrl.u32 %v692, 7
  %v694 = vsub.s32 0, %v693
  %v695 = vrot.slane %v691, %v694
  %v696 = vmul.f32 %v695, %v518
  %v697 = vmul.f32 %v695, %v519
  %v698 = vmul.f32 %v695, %v520
  %v699 = vmul.f32 %v695, %v521
  %v700 = vmul.f32 %v695, %v522
  %v701 = vmul.f32 %v695, %v523
  %v702 = vmul.f32 %v695, %v524
  %v703 = vmul.f32 %v695, %v525
  %v704 = vld [vmem:[%s4 + $0x3] sm:$0x1]
  %v705 = vlaneseq
  %v706 = vshrl.u32 %v705, 7
  %v707 = vsub.s32 0, %v706
  %v708 = vrot.slane %v704, %v707
  %v709 = vadd.f32 %v696, %v708
  %v710 = vadd.f32 %v697, %v708
  %v711 = vadd.f32 %v698, %v708
  %v712 = vadd.f32 %v699, %v708
  %v713 = vadd.f32 %v700, %v708
  %v714 = vadd.f32 %v701, %v708
  %v715 = vadd.f32 %v702, %v708
  %v716 = vadd.f32 %v703, %v708
  %v717 = vtanh.pop %v709
  %v718 = vtanh.pop %v710
  %v719 = vtanh.pop %v711
  %v720 = vtanh.pop %v712
  %v721 = vtanh.pop %v713
  %v722 = vtanh.pop %v714
  %v723 = vtanh.pop %v715
  %v724 = vtanh.pop %v716
  %v725 = vld [vmem:[%s5 + $0x3] sm:$0x1]
  %v726 = vlaneseq
  %v727 = vshrl.u32 %v726, 7
  %v728 = vsub.s32 0, %v727
  %v729 = vrot.slane %v725, %v728
  %v730 = vmul.f32 %v729, %v717
  %v731 = vmul.f32 %v729, %v718
  %v732 = vmul.f32 %v729, %v719
  %v733 = vmul.f32 %v729, %v720
  %v734 = vmul.f32 %v729, %v721
  %v735 = vmul.f32 %v729, %v722
  %v736 = vmul.f32 %v729, %v723
  %v737 = vmul.f32 %v729, %v724
  %v738 = vadd.f32 %v628, %v730
  %v739 = vadd.f32 %v629, %v731
  %v740 = vadd.f32 %v630, %v732
  %v741 = vadd.f32 %v631, %v733
  %v742 = vadd.f32 %v632, %v734
  %v743 = vadd.f32 %v633, %v735
  %v744 = vadd.f32 %v634, %v736
  %v745 = vadd.f32 %v635, %v737
  %v746 = vld [vmem:[%s3 + $0x4] sm:$0x1]
  %v747 = vlaneseq
  %v748 = vshrl.u32 %v747, 7
  %v749 = vsub.s32 0, %v748
  %v750 = vrot.slane %v746, %v749
  %v751 = vmul.f32 %v750, %v518
  %v752 = vmul.f32 %v750, %v519
  %v753 = vmul.f32 %v750, %v520
  %v754 = vmul.f32 %v750, %v521
  %v755 = vmul.f32 %v750, %v522
  %v756 = vmul.f32 %v750, %v523
  %v757 = vmul.f32 %v750, %v524
  %v758 = vmul.f32 %v750, %v525
  %v759 = vld [vmem:[%s4 + $0x4] sm:$0x1]
  %v760 = vlaneseq
  %v761 = vshrl.u32 %v760, 7
  %v762 = vsub.s32 0, %v761
  %v763 = vrot.slane %v759, %v762
  %v764 = vadd.f32 %v751, %v763
  %v765 = vadd.f32 %v752, %v763
  %v766 = vadd.f32 %v753, %v763
  %v767 = vadd.f32 %v754, %v763
  %v768 = vadd.f32 %v755, %v763
  %v769 = vadd.f32 %v756, %v763
  %v770 = vadd.f32 %v757, %v763
  %v771 = vadd.f32 %v758, %v763
  %v772 = vtanh.pop %v764
  %v773 = vtanh.pop %v765
  %v774 = vtanh.pop %v766
  %v775 = vtanh.pop %v767
  %v776 = vtanh.pop %v768
  %v777 = vtanh.pop %v769
  %v778 = vtanh.pop %v770
  %v779 = vtanh.pop %v771
  %v780 = vld [vmem:[%s5 + $0x4] sm:$0x1]
  %v781 = vlaneseq
  %v782 = vshrl.u32 %v781, 7
  %v783 = vsub.s32 0, %v782
  %v784 = vrot.slane %v780, %v783
  %v785 = vmul.f32 %v784, %v772
  %v786 = vmul.f32 %v784, %v773
  %v787 = vmul.f32 %v784, %v774
  %v788 = vmul.f32 %v784, %v775
  %v789 = vmul.f32 %v784, %v776
  %v790 = vmul.f32 %v784, %v777
  %v791 = vmul.f32 %v784, %v778
  %v792 = vmul.f32 %v784, %v779
  %v793 = vadd.f32 %v683, %v785
  %v794 = vadd.f32 %v684, %v786
  %v795 = vadd.f32 %v685, %v787
  %v796 = vadd.f32 %v686, %v788
  %v797 = vadd.f32 %v687, %v789
  %v798 = vadd.f32 %v688, %v790
  %v799 = vadd.f32 %v689, %v791
  %v800 = vadd.f32 %v690, %v792
  %v801 = vld [vmem:[%s3 + $0x5] sm:$0x1]
  %v802 = vlaneseq
  %v803 = vshrl.u32 %v802, 7
  %v804 = vsub.s32 0, %v803
  %v805 = vrot.slane %v801, %v804
  %v806 = vmul.f32 %v805, %v518
  %v807 = vmul.f32 %v805, %v519
  %v808 = vmul.f32 %v805, %v520
  %v809 = vmul.f32 %v805, %v521
  %v810 = vmul.f32 %v805, %v522
  %v811 = vmul.f32 %v805, %v523
  %v812 = vmul.f32 %v805, %v524
  %v813 = vmul.f32 %v805, %v525
  %v814 = vld [vmem:[%s4 + $0x5] sm:$0x1]
  %v815 = vlaneseq
  %v816 = vshrl.u32 %v815, 7
  %v817 = vsub.s32 0, %v816
  %v818 = vrot.slane %v814, %v817
  %v819 = vadd.f32 %v806, %v818
  %v820 = vadd.f32 %v807, %v818
  %v821 = vadd.f32 %v808, %v818
  %v822 = vadd.f32 %v809, %v818
  %v823 = vadd.f32 %v810, %v818
  %v824 = vadd.f32 %v811, %v818
  %v825 = vadd.f32 %v812, %v818
  %v826 = vadd.f32 %v813, %v818
  %v827 = vtanh.pop %v819
  %v828 = vtanh.pop %v820
  %v829 = vtanh.pop %v821
  %v830 = vtanh.pop %v822
  %v831 = vtanh.pop %v823
  %v832 = vtanh.pop %v824
  %v833 = vtanh.pop %v825
  %v834 = vtanh.pop %v826
  %v835 = vld [vmem:[%s5 + $0x5] sm:$0x1]
  %v836 = vlaneseq
  %v837 = vshrl.u32 %v836, 7
  %v838 = vsub.s32 0, %v837
  %v839 = vrot.slane %v835, %v838
  %v840 = vmul.f32 %v839, %v827
  %v841 = vmul.f32 %v839, %v828
  %v842 = vmul.f32 %v839, %v829
  %v843 = vmul.f32 %v839, %v830
  %v844 = vmul.f32 %v839, %v831
  %v845 = vmul.f32 %v839, %v832
  %v846 = vmul.f32 %v839, %v833
  %v847 = vmul.f32 %v839, %v834
  %v848 = vadd.f32 %v738, %v840
  %v849 = vadd.f32 %v739, %v841
  %v850 = vadd.f32 %v740, %v842
  %v851 = vadd.f32 %v741, %v843
  %v852 = vadd.f32 %v742, %v844
  %v853 = vadd.f32 %v743, %v845
  %v854 = vadd.f32 %v744, %v846
  %v855 = vadd.f32 %v745, %v847
  %v856 = vld [vmem:[%s3 + $0x6] sm:$0x1]
  %v857 = vlaneseq
  %v858 = vshrl.u32 %v857, 7
  %v859 = vsub.s32 0, %v858
  %v860 = vrot.slane %v856, %v859
  %v861 = vmul.f32 %v860, %v518
  %v862 = vmul.f32 %v860, %v519
  %v863 = vmul.f32 %v860, %v520
  %v864 = vmul.f32 %v860, %v521
  %v865 = vmul.f32 %v860, %v522
  %v866 = vmul.f32 %v860, %v523
  %v867 = vmul.f32 %v860, %v524
  %v868 = vmul.f32 %v860, %v525
  %v869 = vld [vmem:[%s4 + $0x6] sm:$0x1]
  %v870 = vlaneseq
  %v871 = vshrl.u32 %v870, 7
  %v872 = vsub.s32 0, %v871
  %v873 = vrot.slane %v869, %v872
  %v874 = vadd.f32 %v861, %v873
  %v875 = vadd.f32 %v862, %v873
  %v876 = vadd.f32 %v863, %v873
  %v877 = vadd.f32 %v864, %v873
  %v878 = vadd.f32 %v865, %v873
  %v879 = vadd.f32 %v866, %v873
  %v880 = vadd.f32 %v867, %v873
  %v881 = vadd.f32 %v868, %v873
  %v882 = vtanh.pop %v874
  %v883 = vtanh.pop %v875
  %v884 = vtanh.pop %v876
  %v885 = vtanh.pop %v877
  %v886 = vtanh.pop %v878
  %v887 = vtanh.pop %v879
  %v888 = vtanh.pop %v880
  %v889 = vtanh.pop %v881
  %v890 = vld [vmem:[%s5 + $0x6] sm:$0x1]
  %v891 = vlaneseq
  %v892 = vshrl.u32 %v891, 7
  %v893 = vsub.s32 0, %v892
  %v894 = vrot.slane %v890, %v893
  %v895 = vmul.f32 %v894, %v882
  %v896 = vmul.f32 %v894, %v883
  %v897 = vmul.f32 %v894, %v884
  %v898 = vmul.f32 %v894, %v885
  %v899 = vmul.f32 %v894, %v886
  %v900 = vmul.f32 %v894, %v887
  %v901 = vmul.f32 %v894, %v888
  %v902 = vmul.f32 %v894, %v889
  %v903 = vadd.f32 %v793, %v895
  %v904 = vadd.f32 %v794, %v896
  %v905 = vadd.f32 %v795, %v897
  %v906 = vadd.f32 %v796, %v898
  %v907 = vadd.f32 %v797, %v899
  %v908 = vadd.f32 %v798, %v900
  %v909 = vadd.f32 %v799, %v901
  %v910 = vadd.f32 %v800, %v902
  %v911 = vld [vmem:[%s3 + $0x7] sm:$0x1]
  %v912 = vlaneseq
  %v913 = vshrl.u32 %v912, 7
  %v914 = vsub.s32 0, %v913
  %v915 = vrot.slane %v911, %v914
  %v916 = vmul.f32 %v915, %v518
  %v917 = vmul.f32 %v915, %v519
  %v918 = vmul.f32 %v915, %v520
  %v919 = vmul.f32 %v915, %v521
  %v920 = vmul.f32 %v915, %v522
  %v921 = vmul.f32 %v915, %v523
  %v922 = vmul.f32 %v915, %v524
  %v923 = vmul.f32 %v915, %v525
  %v924 = vld [vmem:[%s4 + $0x7] sm:$0x1]
  %v925 = vlaneseq
  %v926 = vshrl.u32 %v925, 7
  %v927 = vsub.s32 0, %v926
  %v928 = vrot.slane %v924, %v927
  %v929 = vadd.f32 %v916, %v928
  %v930 = vadd.f32 %v917, %v928
  %v931 = vadd.f32 %v918, %v928
  %v932 = vadd.f32 %v919, %v928
  %v933 = vadd.f32 %v920, %v928
  %v934 = vadd.f32 %v921, %v928
  %v935 = vadd.f32 %v922, %v928
  %v936 = vadd.f32 %v923, %v928
  %v937 = vtanh.pop %v929
  %v938 = vtanh.pop %v930
  %v939 = vtanh.pop %v931
  %v940 = vtanh.pop %v932
  %v941 = vtanh.pop %v933
  %v942 = vtanh.pop %v934
  %v943 = vtanh.pop %v935
  %v944 = vtanh.pop %v936
  %v945 = vld [vmem:[%s5 + $0x7] sm:$0x1]
  %v946 = vlaneseq
  %v947 = vshrl.u32 %v946, 7
  %v948 = vsub.s32 0, %v947
  %v949 = vrot.slane %v945, %v948
  %v950 = vmul.f32 %v949, %v937
  %v951 = vmul.f32 %v949, %v938
  %v952 = vmul.f32 %v949, %v939
  %v953 = vmul.f32 %v949, %v940
  %v954 = vmul.f32 %v949, %v941
  %v955 = vmul.f32 %v949, %v942
  %v956 = vmul.f32 %v949, %v943
  %v957 = vmul.f32 %v949, %v944
  %v958 = vadd.f32 %v848, %v950
  %v959 = vadd.f32 %v849, %v951
  %v960 = vadd.f32 %v850, %v952
  %v961 = vadd.f32 %v851, %v953
  %v962 = vadd.f32 %v852, %v954
  %v963 = vadd.f32 %v853, %v955
  %v964 = vadd.f32 %v854, %v956
  %v965 = vadd.f32 %v855, %v957
  %v966 = vld [vmem:[%s3 + $0x8] sm:$0x1]
  %v967 = vlaneseq
  %v968 = vshrl.u32 %v967, 7
  %v969 = vsub.s32 0, %v968
  %v970 = vrot.slane %v966, %v969
  %v971 = vmul.f32 %v970, %v518
  %v972 = vmul.f32 %v970, %v519
  %v973 = vmul.f32 %v970, %v520
  %v974 = vmul.f32 %v970, %v521
  %v975 = vmul.f32 %v970, %v522
  %v976 = vmul.f32 %v970, %v523
  %v977 = vmul.f32 %v970, %v524
  %v978 = vmul.f32 %v970, %v525
  %v979 = vld [vmem:[%s4 + $0x8] sm:$0x1]
  %v980 = vlaneseq
  %v981 = vshrl.u32 %v980, 7
  %v982 = vsub.s32 0, %v981
  %v983 = vrot.slane %v979, %v982
  %v984 = vadd.f32 %v971, %v983
  %v985 = vadd.f32 %v972, %v983
  %v986 = vadd.f32 %v973, %v983
  %v987 = vadd.f32 %v974, %v983
  %v988 = vadd.f32 %v975, %v983
  %v989 = vadd.f32 %v976, %v983
  %v990 = vadd.f32 %v977, %v983
  %v991 = vadd.f32 %v978, %v983
  %v992 = vtanh.pop %v984
  %v993 = vtanh.pop %v985
  %v994 = vtanh.pop %v986
  %v995 = vtanh.pop %v987
  %v996 = vtanh.pop %v988
  %v997 = vtanh.pop %v989
  %v998 = vtanh.pop %v990
  %v999 = vtanh.pop %v991
  %v1000 = vld [vmem:[%s5 + $0x8] sm:$0x1]
  %v1001 = vlaneseq
  %v1002 = vshrl.u32 %v1001, 7
  %v1003 = vsub.s32 0, %v1002
  %v1004 = vrot.slane %v1000, %v1003
  %v1005 = vmul.f32 %v1004, %v992
  %v1006 = vmul.f32 %v1004, %v993
  %v1007 = vmul.f32 %v1004, %v994
  %v1008 = vmul.f32 %v1004, %v995
  %v1009 = vmul.f32 %v1004, %v996
  %v1010 = vmul.f32 %v1004, %v997
  %v1011 = vmul.f32 %v1004, %v998
  %v1012 = vmul.f32 %v1004, %v999
  %v1013 = vadd.f32 %v903, %v1005
  %v1014 = vadd.f32 %v904, %v1006
  %v1015 = vadd.f32 %v905, %v1007
  %v1016 = vadd.f32 %v906, %v1008
  %v1017 = vadd.f32 %v907, %v1009
  %v1018 = vadd.f32 %v908, %v1010
  %v1019 = vadd.f32 %v909, %v1011
  %v1020 = vadd.f32 %v910, %v1012
  %v1021 = vld [vmem:[%s3 + $0x9] sm:$0x1]
  %v1022 = vlaneseq
  %v1023 = vshrl.u32 %v1022, 7
  %v1024 = vsub.s32 0, %v1023
  %v1025 = vrot.slane %v1021, %v1024
  %v1026 = vmul.f32 %v1025, %v518
  %v1027 = vmul.f32 %v1025, %v519
  %v1028 = vmul.f32 %v1025, %v520
  %v1029 = vmul.f32 %v1025, %v521
  %v1030 = vmul.f32 %v1025, %v522
  %v1031 = vmul.f32 %v1025, %v523
  %v1032 = vmul.f32 %v1025, %v524
  %v1033 = vmul.f32 %v1025, %v525
  %v1034 = vld [vmem:[%s4 + $0x9] sm:$0x1]
  %v1035 = vlaneseq
  %v1036 = vshrl.u32 %v1035, 7
  %v1037 = vsub.s32 0, %v1036
  %v1038 = vrot.slane %v1034, %v1037
  %v1039 = vadd.f32 %v1026, %v1038
  %v1040 = vadd.f32 %v1027, %v1038
  %v1041 = vadd.f32 %v1028, %v1038
  %v1042 = vadd.f32 %v1029, %v1038
  %v1043 = vadd.f32 %v1030, %v1038
  %v1044 = vadd.f32 %v1031, %v1038
  %v1045 = vadd.f32 %v1032, %v1038
  %v1046 = vadd.f32 %v1033, %v1038
  %v1047 = vtanh.pop %v1039
  %v1048 = vtanh.pop %v1040
  %v1049 = vtanh.pop %v1041
  %v1050 = vtanh.pop %v1042
  %v1051 = vtanh.pop %v1043
  %v1052 = vtanh.pop %v1044
  %v1053 = vtanh.pop %v1045
  %v1054 = vtanh.pop %v1046
  %v1055 = vld [vmem:[%s5 + $0x9] sm:$0x1]
  %v1056 = vlaneseq
  %v1057 = vshrl.u32 %v1056, 7
  %v1058 = vsub.s32 0, %v1057
  %v1059 = vrot.slane %v1055, %v1058
  %v1060 = vmul.f32 %v1059, %v1047
  %v1061 = vmul.f32 %v1059, %v1048
  %v1062 = vmul.f32 %v1059, %v1049
  %v1063 = vmul.f32 %v1059, %v1050
  %v1064 = vmul.f32 %v1059, %v1051
  %v1065 = vmul.f32 %v1059, %v1052
  %v1066 = vmul.f32 %v1059, %v1053
  %v1067 = vmul.f32 %v1059, %v1054
  %v1068 = vadd.f32 %v958, %v1060
  %v1069 = vadd.f32 %v959, %v1061
  %v1070 = vadd.f32 %v960, %v1062
  %v1071 = vadd.f32 %v961, %v1063
  %v1072 = vadd.f32 %v962, %v1064
  %v1073 = vadd.f32 %v963, %v1065
  %v1074 = vadd.f32 %v964, %v1066
  %v1075 = vadd.f32 %v965, %v1067
  %v1076 = vadd.f32 %v1013, %v1068
  %v1077 = vadd.f32 %v1014, %v1069
  %v1078 = vadd.f32 %v1015, %v1070
  %v1079 = vadd.f32 %v1016, %v1071
  %v1080 = vadd.f32 %v1017, %v1072
  %v1081 = vadd.f32 %v1018, %v1073
  %v1082 = vadd.f32 %v1019, %v1074
  %v1083 = vadd.f32 %v1020, %v1075
  %v1084 = vld [vmem:[%s6] sm:$0x1]
  %v1086 = vlaneseq
  %v1087 = vshrl.u32 %v1086, 7
  %v1088 = vsub.s32 0, %v1087
  %v1089 = vrot.slane %v1084, %v1088
  %v1091 = vadd.f32 %v1076, %v1089
  %v1092 = vadd.f32 %v1077, %v1089
  %v1093 = vadd.f32 %v1078, %v1089
  %v1094 = vadd.f32 %v1079, %v1089
  %v1095 = vadd.f32 %v1080, %v1089
  %v1096 = vadd.f32 %v1081, %v1089
  %v1097 = vadd.f32 %v1082, %v1089
  %v1098 = vadd.f32 %v1083, %v1089
  %v1107 = vrot.slane %v1091, 7
  %v1108 = vrot.slane %v1092, 7
  %v1109 = vsel %vm50, %v1107, %v1108
  %v1110 = vrot.slane %v1093, 7
  %v1111 = vsel %vm50, %v1108, %v1110
  %v1112 = vrot.slane %v1094, 7
  %v1113 = vsel %vm50, %v1110, %v1112
  %v1114 = vrot.slane %v1095, 7
  %v1115 = vsel %vm50, %v1112, %v1114
  %v1116 = vrot.slane %v1096, 7
  %v1117 = vsel %vm50, %v1114, %v1116
  %v1118 = vrot.slane %v1097, 7
  %v1119 = vsel %vm50, %v1116, %v1118
  %v1120 = vrot.slane %v1098, 7
  %v1121 = vsel %vm50, %v1118, %v1120
  %v1130 = vsel %vm50, 0.0, %v1107
  %v1131 = vld [vmem:[%s7] sm:$0x1]
  %v1132 = vlaneseq
  %v1133 = vshrl.u32 %v1132, 7
  %v1134 = vsub.s32 0, %v1133
  %v1135 = vrot.slane %v1131, %v1134
  %v1136 = vmul.f32 %v1135, %v1130
  %v1137 = vmul.f32 %v1135, %v1109
  %v1138 = vmul.f32 %v1135, %v1111
  %v1139 = vmul.f32 %v1135, %v1113
  %v1140 = vmul.f32 %v1135, %v1115
  %v1141 = vmul.f32 %v1135, %v1117
  %v1142 = vmul.f32 %v1135, %v1119
  %v1143 = vmul.f32 %v1135, %v1121
  %v1144 = vadd.f32 %v1136, 0.0
  %v1145 = vadd.f32 %v1137, 0.0
  %v1146 = vadd.f32 %v1138, 0.0
  %v1147 = vadd.f32 %v1139, 0.0
  %v1148 = vadd.f32 %v1140, 0.0
  %v1149 = vadd.f32 %v1141, 0.0
  %v1150 = vadd.f32 %v1142, 0.0
  %v1151 = vadd.f32 %v1143, 0.0
  %v1152 = vrot.slane %v1091, 6
  %v1153 = vrot.slane %v1092, 6
  %v1154 = vsel %vm96, %v1152, %v1153
  %v1155 = vrot.slane %v1093, 6
  %v1156 = vsel %vm96, %v1153, %v1155
  %v1157 = vrot.slane %v1094, 6
  %v1158 = vsel %vm96, %v1155, %v1157
  %v1159 = vrot.slane %v1095, 6
  %v1160 = vsel %vm96, %v1157, %v1159
  %v1161 = vrot.slane %v1096, 6
  %v1162 = vsel %vm96, %v1159, %v1161
  %v1163 = vrot.slane %v1097, 6
  %v1164 = vsel %vm96, %v1161, %v1163
  %v1165 = vrot.slane %v1098, 6
  %v1166 = vsel %vm96, %v1163, %v1165
  %v1175 = vsel %vm96, 0.0, %v1152
  %v1176 = vld [vmem:[%s7 + $0x1] sm:$0x1]
  %v1177 = vlaneseq
  %v1178 = vshrl.u32 %v1177, 7
  %v1179 = vsub.s32 0, %v1178
  %v1180 = vrot.slane %v1176, %v1179
  %v1181 = vmul.f32 %v1180, %v1175
  %v1182 = vmul.f32 %v1180, %v1154
  %v1183 = vmul.f32 %v1180, %v1156
  %v1184 = vmul.f32 %v1180, %v1158
  %v1185 = vmul.f32 %v1180, %v1160
  %v1186 = vmul.f32 %v1180, %v1162
  %v1187 = vmul.f32 %v1180, %v1164
  %v1188 = vmul.f32 %v1180, %v1166
  %v1189 = vadd.f32 %v1144, %v1181
  %v1190 = vadd.f32 %v1145, %v1182
  %v1191 = vadd.f32 %v1146, %v1183
  %v1192 = vadd.f32 %v1147, %v1184
  %v1193 = vadd.f32 %v1148, %v1185
  %v1194 = vadd.f32 %v1149, %v1186
  %v1195 = vadd.f32 %v1150, %v1187
  %v1196 = vadd.f32 %v1151, %v1188
  %v1197 = vrot.slane %v1091, 5
  %v1198 = vrot.slane %v1092, 5
  %v1199 = vsel %vm142, %v1197, %v1198
  %v1200 = vrot.slane %v1093, 5
  %v1201 = vsel %vm142, %v1198, %v1200
  %v1202 = vrot.slane %v1094, 5
  %v1203 = vsel %vm142, %v1200, %v1202
  %v1204 = vrot.slane %v1095, 5
  %v1205 = vsel %vm142, %v1202, %v1204
  %v1206 = vrot.slane %v1096, 5
  %v1207 = vsel %vm142, %v1204, %v1206
  %v1208 = vrot.slane %v1097, 5
  %v1209 = vsel %vm142, %v1206, %v1208
  %v1210 = vrot.slane %v1098, 5
  %v1211 = vsel %vm142, %v1208, %v1210
  %v1220 = vsel %vm142, 0.0, %v1197
  %v1221 = vld [vmem:[%s7 + $0x2] sm:$0x1]
  %v1222 = vlaneseq
  %v1223 = vshrl.u32 %v1222, 7
  %v1224 = vsub.s32 0, %v1223
  %v1225 = vrot.slane %v1221, %v1224
  %v1226 = vmul.f32 %v1225, %v1220
  %v1227 = vmul.f32 %v1225, %v1199
  %v1228 = vmul.f32 %v1225, %v1201
  %v1229 = vmul.f32 %v1225, %v1203
  %v1230 = vmul.f32 %v1225, %v1205
  %v1231 = vmul.f32 %v1225, %v1207
  %v1232 = vmul.f32 %v1225, %v1209
  %v1233 = vmul.f32 %v1225, %v1211
  %v1234 = vadd.f32 %v1189, %v1226
  %v1235 = vadd.f32 %v1190, %v1227
  %v1236 = vadd.f32 %v1191, %v1228
  %v1237 = vadd.f32 %v1192, %v1229
  %v1238 = vadd.f32 %v1193, %v1230
  %v1239 = vadd.f32 %v1194, %v1231
  %v1240 = vadd.f32 %v1195, %v1232
  %v1241 = vadd.f32 %v1196, %v1233
  %v1242 = vrot.slane %v1091, 4
  %v1243 = vrot.slane %v1092, 4
  %v1244 = vsel %vm188, %v1242, %v1243
  %v1245 = vrot.slane %v1093, 4
  %v1246 = vsel %vm188, %v1243, %v1245
  %v1247 = vrot.slane %v1094, 4
  %v1248 = vsel %vm188, %v1245, %v1247
  %v1249 = vrot.slane %v1095, 4
  %v1250 = vsel %vm188, %v1247, %v1249
  %v1251 = vrot.slane %v1096, 4
  %v1252 = vsel %vm188, %v1249, %v1251
  %v1253 = vrot.slane %v1097, 4
  %v1254 = vsel %vm188, %v1251, %v1253
  %v1255 = vrot.slane %v1098, 4
  %v1256 = vsel %vm188, %v1253, %v1255
  %v1265 = vsel %vm188, 0.0, %v1242
  %v1266 = vld [vmem:[%s7 + $0x3] sm:$0x1]
  %v1267 = vlaneseq
  %v1268 = vshrl.u32 %v1267, 7
  %v1269 = vsub.s32 0, %v1268
  %v1270 = vrot.slane %v1266, %v1269
  %v1271 = vmul.f32 %v1270, %v1265
  %v1272 = vmul.f32 %v1270, %v1244
  %v1273 = vmul.f32 %v1270, %v1246
  %v1274 = vmul.f32 %v1270, %v1248
  %v1275 = vmul.f32 %v1270, %v1250
  %v1276 = vmul.f32 %v1270, %v1252
  %v1277 = vmul.f32 %v1270, %v1254
  %v1278 = vmul.f32 %v1270, %v1256
  %v1279 = vadd.f32 %v1234, %v1271
  %v1280 = vadd.f32 %v1235, %v1272
  %v1281 = vadd.f32 %v1236, %v1273
  %v1282 = vadd.f32 %v1237, %v1274
  %v1283 = vadd.f32 %v1238, %v1275
  %v1284 = vadd.f32 %v1239, %v1276
  %v1285 = vadd.f32 %v1240, %v1277
  %v1286 = vadd.f32 %v1241, %v1278
  %1287 = vst [vmem:[#allocation2] sm:$0xff] %v1279
  %1288 = vst [vmem:[#allocation2 + $0x8] sm:$0xff] %v1280
  %1289 = vst [vmem:[#allocation2 + $0x10] sm:$0xff] %v1281
  %1290 = vst [vmem:[#allocation2 + $0x18] sm:$0xff] %v1282
  %1291 = vst [vmem:[#allocation2 + $0x20] sm:$0xff] %v1283
  %1292 = vst [vmem:[#allocation2 + $0x28] sm:$0xff] %v1284
  %1293 = vst [vmem:[#allocation2 + $0x30] sm:$0xff] %v1285
  %1294 = vst [vmem:[#allocation2 + $0x38] sm:$0xff] %v1286
  %v1295 = vld [vmem:[%s8] sm:$0x1]
  %v1296 = vld [vmem:[%s8 + $0x1] sm:$0x1]
  %v1297 = vld [vmem:[%s8 + $0x2] sm:$0x1]
  %v1298 = vld [vmem:[%s8 + $0x3] sm:$0x1]
  loop: start=0, step=1, limit=8
  $region45: #{parallel_wh_resnet.1} parent=0 // loop_pre_header
    _
  $region46: #{parallel_wh_resnet.1} parent=0 // loop_header
    %s1300 = sphi 0, %s1304
    %p1301 = scmp.ge.s32.totalorder %s1300, 8
    %v1305 = vphi 0.0, %v1426
    %v1306 = vphi 0.0, %v1412
    %v1307 = vphi 0.0, %v1398
    %v1308 = vphi 0.0, %v1384
  $region47: #{parallel_wh_resnet.1} parent=0 // loop_header_branch
    %1303 = sbr.rel (%p1301) target = $region51
  $region48: #{parallel_wh_resnet.1} parent=0 // loop_body
    %s1309 = smul.u32 %s1300, 8
    %s1310 = scalar_lea.vmem [#allocation2], %s1309
    %v1311 = vld [vmem:[%s1310] sm:$0xff]
    %v1313 = vrot.slane %v1305, 7
    %v1315 = vmul.f32 %v1295, %v1313
    %v1317 = vrot.slane %v1306, 6
    %v1319 = vmul.f32 %v1296, %v1317
    %v1321 = vrot.slane %v1307, 5
    %v1323 = vmul.f32 %v1297, %v1321
    %v1325 = vrot.slane %v1308, 4
    %v1327 = vmul.f32 %v1298, %v1325
    %v1328 = vadd.f32 %v1315, %v1319
    %v1329 = vadd.f32 %v1323, %v1327
    %v1330 = vadd.f32 %v1328, %v1329
    %v1331 = vsub.f32 %v1311, %v1330
    %v1332 = vmul.f32 %v1295, %v1331
    %v1333 = vmul.f32 %v1296, %v1313
    %v1334 = vmul.f32 %v1297, %v1317
    %v1335 = vmul.f32 %v1298, %v1321
    %v1336 = vadd.f32 %v1332, %v1333
    %v1337 = vadd.f32 %v1334, %v1335
    %v1338 = vadd.f32 %v1336, %v1337
    %v1340 = vrot.slane %v1338, 7
    %v1342 = vsub.f32 %v1311, %v1340
    %v1344 = vrot.slane %v1342, 1
    %v1346 = vmul.f32 %v1295, %v1344
    %v1347 = vmul.f32 %v1296, %v1331
    %v1348 = vmul.f32 %v1297, %v1313
    %v1349 = vmul.f32 %v1298, %v1317
    %v1350 = vadd.f32 %v1346, %v1347
    %v1351 = vadd.f32 %v1348, %v1349
    %v1352 = vadd.f32 %v1350, %v1351
    %v1354 = vrot.slane %v1352, 6
    %v1356 = vsub.f32 %v1311, %v1354
    %v1358 = vrot.slane %v1356, 2
    %v1360 = vmul.f32 %v1295, %v1358
    %v1361 = vmul.f32 %v1296, %v1344
    %v1362 = vmul.f32 %v1297, %v1331
    %v1363 = vmul.f32 %v1298, %v1313
    %v1364 = vadd.f32 %v1360, %v1361
    %v1365 = vadd.f32 %v1362, %v1363
    %v1366 = vadd.f32 %v1364, %v1365
    %v1368 = vrot.slane %v1366, 5
    %v1370 = vsub.f32 %v1311, %v1368
    %v1372 = vrot.slane %v1370, 3
    %v1374 = vmul.f32 %v1295, %v1372
    %v1375 = vmul.f32 %v1296, %v1358
    %v1376 = vmul.f32 %v1297, %v1344
    %v1377 = vmul.f32 %v1298, %v1331
    %v1378 = vadd.f32 %v1374, %v1375
    %v1379 = vadd.f32 %v1376, %v1377
    %v1380 = vadd.f32 %v1378, %v1379
    %v1382 = vrot.slane %v1380, 4
    %v1384 = vsub.f32 %v1311, %v1382
    %v1386 = vrot.slane %v1384, 4
    %v1388 = vmul.f32 %v1295, %v1386
    %v1389 = vmul.f32 %v1296, %v1372
    %v1390 = vmul.f32 %v1297, %v1358
    %v1391 = vmul.f32 %v1298, %v1344
    %v1392 = vadd.f32 %v1388, %v1389
    %v1393 = vadd.f32 %v1390, %v1391
    %v1394 = vadd.f32 %v1392, %v1393
    %v1396 = vrot.slane %v1394, 3
    %v1398 = vsub.f32 %v1311, %v1396
    %v1400 = vrot.slane %v1398, 5
    %v1402 = vmul.f32 %v1295, %v1400
    %v1403 = vmul.f32 %v1296, %v1386
    %v1404 = vmul.f32 %v1297, %v1372
    %v1405 = vmul.f32 %v1298, %v1358
    %v1406 = vadd.f32 %v1402, %v1403
    %v1407 = vadd.f32 %v1404, %v1405
    %v1408 = vadd.f32 %v1406, %v1407
    %v1410 = vrot.slane %v1408, 2
    %v1412 = vsub.f32 %v1311, %v1410
    %v1414 = vrot.slane %v1412, 6
    %v1416 = vmul.f32 %v1295, %v1414
    %v1417 = vmul.f32 %v1296, %v1400
    %v1418 = vmul.f32 %v1297, %v1386
    %v1419 = vmul.f32 %v1298, %v1372
    %v1420 = vadd.f32 %v1416, %v1417
    %v1421 = vadd.f32 %v1418, %v1419
    %v1422 = vadd.f32 %v1420, %v1421
    %v1424 = vrot.slane %v1422, 1
    %v1426 = vsub.f32 %v1311, %v1424
    %v1427 = vsel %vm50, %v1331, %v1342
    %v1428 = vsel %vm96, %v1427, %v1356
    %v1429 = vsel %vm142, %v1428, %v1370
    %v1430 = vsel %vm188, %v1429, %v1384
    %v1431 = vsel %vm234, %v1430, %v1398
    %v1432 = vsel %vm280, %v1431, %v1412
    %vm1433 = vcmask 1046528
    %v1434 = vsel %vm1433, %v1432, %v1426
    %s1435 = scalar_lea.vmem %s10, %s1309
    %1436 = vst [vmem:[%s1435] sm:$0xff] %v1434
  $region49: #{parallel_wh_resnet.1} parent=0 // loop_footer
    %s1304 = sadd.s32 1, %s1300
  $region50: #{parallel_wh_resnet.1} parent=0 // loop_footer_branch
    %1299 = sbr.rel target = $region46
  $region51: #{parallel_wh_resnet.1} parent=0 // loop_exit
    _
  // Predicated region
  $region52: #{parallel_wh_resnet.1} parent=0 // pred_check
    _
  $region53: #{parallel_wh_resnet.1} parent=0 // pred_check_branch
    %1438 = sbr.rel (0) target = $region55
  $region54: #{parallel_wh_resnet.1} parent=0 // pred_region
    _
  $region55: #{parallel_wh_resnet.1} parent=0 // pred_fallthru
    _
  // Predicated region
  $region56: #{parallel_wh_resnet.1} parent=0 // pred_check
    _
  $region57: #{parallel_wh_resnet.1} parent=0 // pred_check_branch
    %1440 = sbr.rel (0) target = $region59
  $region58: #{parallel_wh_resnet.1} parent=0 // pred_region
    _
  $region59: #{parallel_wh_resnet.1} parent=0 // pred_fallthru
    _
  // Predicated region
  $region60: #{parallel_wh_resnet.1} parent=0 // pred_check
    _
  $region61: #{parallel_wh_resnet.1} parent=0 // pred_check_branch
    %1442 = sbr.rel (0) target = $region63
  $region62: #{parallel_wh_resnet.1} parent=0 // pred_region
    _
  $region63: #{parallel_wh_resnet.1} parent=0 // pred_fallthru
    _
  // Predicated region
  $region64: #{parallel_wh_resnet.1} parent=0 // pred_check
    _
  $region65: #{parallel_wh_resnet.1} parent=0 // pred_check_branch
    %1444 = sbr.rel (0) target = $region67
  $region66: #{parallel_wh_resnet.1} parent=0 // pred_region
    _
  $region67: #{parallel_wh_resnet.1} parent=0 // pred_fallthru
    _

</llo_original>
